<compile_context>
chip_gen: v6e
topology: v6e:2x2x1
jax: 0.10.0
libtpu: 0.0.40
codegen_flags: <defaults>
</compile_context>

<pallas_src>
import functools

import jax
import jax.numpy as jnp
from jax import lax
from jax.experimental import pallas as pl
from jax.experimental.pallas import tpu as pltpu


def self_attention_kernel(x_ref, wqkv_ref, bqkv_ref, gamma_ref, o_ref, *, C, N, BB):
    """One grid step processes BB batch elements of the (B, C, N) activation."""
    w = wqkv_ref[...]                  # (3C, C) bf16, 1/sqrt(C) folded into q rows
    bias = bqkv_ref[...]               # (3C, 1) f32 (added post-accumulation)
    gamma = gamma_ref[0]               # scalar from SMEM

    # Short static loop over the batches of this block.  Each iteration stores
    # its (C, N) result immediately, so live vreg pressure stays bounded
    # (no accumulate + jnp.concatenate materialization).
    for i in range(BB):
        xb = x_ref[i]                                              # (C, N) input dtype
        xb_mx = xb.astype(jnp.bfloat16)                            # MXU operand

        # Fused 1x1-conv QKV projection: one (3C, C) @ (C, N) MXU matmul,
        # bf16 operands, f32 accumulation.
        qkv = jnp.dot(w, xb_mx, preferred_element_type=jnp.float32) + bias
        q = qkv[0 * C:1 * C, :]                                    # already * 1/sqrt(C)
        k = qkv[1 * C:2 * C, :]
        v = qkv[2 * C:3 * C, :]

        # attn = softmax(q @ k^T); contract the last dims of both operands so
        # no explicit transpose of k is needed.  Softmax math stays f32.
        attn = lax.dot_general(
            q.astype(jnp.bfloat16), k.astype(jnp.bfloat16),
            dimension_numbers=(((1,), (1,)), ((), ())),
            preferred_element_type=jnp.float32)                    # (C, C)
        attn = attn - jnp.max(attn, axis=-1, keepdims=True)
        p = jnp.exp(attn)
        p = p * pl.reciprocal(jnp.sum(p, axis=-1, keepdims=True), approx=True)

        # out = v @ attn  (literal torch.bmm(v, attn); requires N == C).
        out = jnp.dot(v.astype(jnp.bfloat16), p.astype(jnp.bfloat16),
                      preferred_element_type=jnp.float32)          # (C, N)

        # Residual in f32; direct per-batch, lane-dense (N % 128 == 0) store.
        o_ref[i] = (gamma * out + xb.astype(jnp.float32)).astype(o_ref.dtype)


def _num_tensorcores():
    """Best-effort TensorCores per device (v5e/v6e: 1, v7x: 2). Safe fallback 1."""
    try:
        return max(int(getattr(jax.devices()[0], "num_cores", 1)), 1)
    except Exception:
        return 1


def self_attention(x_nchw, wq, bq, wk, bk, wv, bv, gamma, *,
                   batch_block=None, out_dtype=jnp.float32):
    B, C, H, W = x_nchw.shape
    N = H * W
    assert N == C, "module's bmm(v, attn) requires H*W == C"
    assert N % 128 == 0 and C % 8 == 0, "keep blocks aligned to the (8, 128) vreg tile"

    # ---- tiling: core-count-aware batch block ------------------------------
    # Single wide step on 1-TC chips (grid steps only add ~0.35 us overhead);
    # >= num_cores "parallel" steps on multi-TC chips (v7x) so the grid can be
    # sharded across TensorCores.  Cap the block so double-buffered I/O tiles
    # stay well under scoped VMEM (and under the 64-vreg-friendly loop length).
    MAX_BB = 8                                    # <= 1024 lanes per step at N=128
    if batch_block is None:
        ncores = _num_tensorcores()
        if ncores >= 2 and B % ncores == 0:
            batch_block = min(max(B // ncores, 1), MAX_BB)
        else:
            batch_block = min(B, MAX_BB)
        while B % batch_block != 0:
            batch_block -= 1
    assert 1 <= batch_block <= B and B % batch_block == 0
    num_blocks = B // batch_block

    # ---- one-time weight prep (not per-activation work) --------------------
    inv_sqrt_c = 1.0 / (C ** 0.5)
    w_qkv = jnp.concatenate([wq * inv_sqrt_c, wk, wv], axis=0)     # fold 1/sqrt(C)
    w_qkv = w_qkv.astype(jnp.bfloat16)                             # MXU operand
    b_qkv = jnp.concatenate([bq * inv_sqrt_c, bk, bv], axis=0)
    b_qkv = b_qkv.reshape(3 * C, 1).astype(jnp.float32)            # post-acc add
    g = gamma.reshape(1).astype(jnp.float32)                       # scalar in SMEM

    # Activation keeps its incoming layout/dtype: (B,C,H,W)->(B,C,N) is a free
    # reshape (no extra HBM transpose/cast pass); the kernel casts the MXU
    # operand to bf16 internally.  Feeding bf16 activations halves input DMA.
    x = x_nchw.reshape(B, C, N)

    kernel = functools.partial(self_attention_kernel, C=C, N=N, BB=batch_block)

    # Explicit VMEM budget (v7x scoped default is 32 MiB of 64 MiB physical).
    blk = batch_block * C * N
    vmem_need = (2 * blk * x.dtype.itemsize                        # x, double-buffered
                 + 2 * blk * jnp.dtype(out_dtype).itemsize         # out, double-buffered
                 + 2 * (3 * C * C * 2 + 3 * C * 4)                 # weights + bias
                 + (3 * C * N + 2 * C * C) * 4)                    # per-batch intermediates
    vmem_limit = int(min(max(2 * vmem_need, 8 << 20), 32 << 20))

    out = pl.pallas_call(
        kernel,
        out_shape=jax.ShapeDtypeStruct((B, C, N), out_dtype),
        grid_spec=pltpu.PrefetchScalarGridSpec(
            num_scalar_prefetch=0,
            grid=(num_blocks,),
            in_specs=[
                # x: if the grid grows large and the input DMA becomes exposed,
                # add pipeline_mode=pl.Buffered(3) here.
                pl.BlockSpec((batch_block, C, N), lambda gb: (gb, 0, 0)),
                pl.BlockSpec((3 * C, C), lambda gb: (0, 0)),       # W_qkv (grid-invariant)
                pl.BlockSpec((3 * C, 1), lambda gb: (0, 0)),       # b_qkv
                pl.BlockSpec(memory_space=pltpu.MemorySpace.SMEM), # gamma (scalar)
            ],
            out_specs=pl.BlockSpec((batch_block, C, N), lambda gb: (gb, 0, 0)),
        ),
        compiler_params=pltpu.CompilerParams(
            dimension_semantics=("parallel",),
            vmem_limit_bytes=vmem_limit),
    )(x, w_qkv, b_qkv, g)

    return out.reshape(B, C, H, W)


def self_attention_ref(x_nchw, wq, bq, wk, bk, wv, bv, gamma):
    """Pure-JAX f32 reference mirroring the PyTorch forward."""
    B, C, H, W = x_nchw.shape
    x = x_nchw.reshape(B, C, H * W)
    q = jnp.einsum('oc,bcn->bon', wq, x) + bq[None, :, None]
    k = jnp.einsum('oc,bcn->bon', wk, x) + bk[None, :, None]
    v = jnp.einsum('oc,bcn->bon', wv, x) + bv[None, :, None]
    attn = jnp.einsum('bcn,bdn->bcd', q, k) / (C ** 0.5)
    attn = jax.nn.softmax(attn, axis=-1)
    out = jnp.einsum('bcn,bnd->bcd', v, attn)        # torch.bmm(v, attn)
    return (gamma * out + x).reshape(B, C, H, W)


if __name__ == "__main__":
    # H*W == C as required by the module's bmm; C=128 / N=128 keep every tile
    # and lane slice aligned to the (8, 128) vreg layout.
    B, C, H, W = 2, 128, 8, 16

    key = jax.random.PRNGKey(0)
    kx, kq, kbq, kk, kbk, kv, kbv = jax.random.split(key, 7)

    x = jax.random.normal(kx, (B, C, H, W), dtype=jnp.float32)

    # Conv2d(channels, channels, kernel_size=1) -> weight (C, C), bias (C,)
    scale = 1.0 / (C ** 0.5)
    wq = jax.random.uniform(kq, (C, C), minval=-scale, maxval=scale, dtype=jnp.float32)
    bq = jax.random.uniform(kbq, (C,), minval=-scale, maxval=scale, dtype=jnp.float32)
    wk = jax.random.uniform(kk, (C, C), minval=-scale, maxval=scale, dtype=jnp.float32)
    bk = jax.random.uniform(kbk, (C,), minval=-scale, maxval=scale, dtype=jnp.float32)
    wv = jax.random.uniform(kv, (C, C), minval=-scale, maxval=scale, dtype=jnp.float32)
    bv = jax.random.uniform(kbv, (C,), minval=-scale, maxval=scale, dtype=jnp.float32)
    # Module inits gamma=0 (output == x); use a nonzero value so the attention
    # path is actually exercised/verified.
    gamma = jnp.array([0.5], dtype=jnp.float32)

    ref = self_attention_ref(x, wq, bq, wk, bk, wv, bv, gamma)

    # Exercise the core-count-aware default plus both the multi-step (BB=1)
    # and single-step (BB=B) code paths.
    for bb in (None, 1, B):
        out = self_attention(x, wq, bq, wk, bk, wv, bv, gamma, batch_block=bb)
        jax.block_until_ready(out)
        assert out.shape == (B, C, H, W)
        max_err = float(jnp.max(jnp.abs(out - ref)))
        # bf16 MXU operands (f32 accumulation) + approx softmax reciprocal are
        # deliberate precision trades; tolerance loosened accordingly.
        assert jnp.allclose(out, ref, atol=2e-2, rtol=2e-2), (
            f"mismatch vs reference (batch_block={bb}, max abs err {max_err})")

    print("KERNEL_OK")
</pallas_src>

<mosaic_0001>
module attributes {stable_mosaic.version = 11 : i64} {
  func.func @self_attention_kernel(%arg0: i32, %arg1: memref<2x128x128xf32, #tpu.memory_space<vmem>>, %arg2: memref<384x128xbf16, #tpu.memory_space<vmem>>, %arg3: memref<384x1xf32, #tpu.memory_space<vmem>>, %arg4: memref<1xf32, #tpu.memory_space<smem>>, %arg5: memref<2x128x128xf32, #tpu.memory_space<vmem>>) attributes {dimension_semantics = [#tpu.dimension_semantics<parallel>], iteration_bounds = array<i64: 1>, scalar_prefetch = 0 : i64, scratch_operands = 0 : i64, tpu.core_type = #tpu.core_type<tc>, window_params = [{transform_indices = @transform_0, window_bounds = array<i64: 2, 128, 128>}, {pipeline_mode = #tpu.pipeline_mode<synchronous>, transform_indices = @transform_1, window_bounds = array<i64: 384, 128>}, {pipeline_mode = #tpu.pipeline_mode<synchronous>, transform_indices = @transform_2, window_bounds = array<i64: 384, 1>}, {transform_indices = @transform_3, window_bounds = array<i64: 1>}, {transform_indices = @transform_4, window_bounds = array<i64: 2, 128, 128>}]} {
    %c0 = arith.constant 0 : index
    %c0_0 = arith.constant 0 : index
    %0 = vector.load %arg2[%c0, %c0_0] : memref<384x128xbf16, #tpu.memory_space<vmem>>, vector<384x128xbf16>
    %c0_1 = arith.constant 0 : index
    %c0_2 = arith.constant 0 : index
    %1 = vector.load %arg3[%c0_1, %c0_2] : memref<384x1xf32, #tpu.memory_space<vmem>>, vector<384x1xf32>
    %c0_3 = arith.constant 0 : index
    %2 = memref.load %arg4[%c0_3] : memref<1xf32, #tpu.memory_space<smem>>
    %c0_4 = arith.constant 0 : index
    %c0_5 = arith.constant 0 : index
    %c0_6 = arith.constant 0 : index
    %3 = vector.load %arg1[%c0_4, %c0_5, %c0_6] : memref<2x128x128xf32, #tpu.memory_space<vmem>>, vector<1x128x128xf32>
    %4 = vector.shape_cast %3 : vector<1x128x128xf32> to vector<128x128xf32>
    %5 = arith.truncf %4 : vector<128x128xf32> to vector<128x128xbf16>
    %cst = arith.constant dense<0.000000e+00> : vector<384x128xf32>
    %6 = tpu.matmul %0, %5, %cst {dimension_numbers = #tpu.dot_dimension_numbers<[1], [0], [0], [1], [0, 0, 1, 1], [], []>} : vector<384x128xbf16>, vector<128x128xbf16>, vector<384x128xf32> -> vector<384x128xf32>
    %7 = vector.broadcast %1 : vector<384x1xf32> to vector<384x128xf32>
    %8 = arith.addf %6, %7 : vector<384x128xf32>
    %9 = vector.extract_strided_slice %8 {offsets = [0, 0], sizes = [128, 128], strides = [1, 1]} : vector<384x128xf32> to vector<128x128xf32>
    %10 = vector.extract_strided_slice %8 {offsets = [128, 0], sizes = [128, 128], strides = [1, 1]} : vector<384x128xf32> to vector<128x128xf32>
    %11 = vector.extract_strided_slice %8 {offsets = [256, 0], sizes = [128, 128], strides = [1, 1]} : vector<384x128xf32> to vector<128x128xf32>
    %12 = arith.truncf %9 : vector<128x128xf32> to vector<128x128xbf16>
    %13 = arith.truncf %10 : vector<128x128xf32> to vector<128x128xbf16>
    %cst_7 = arith.constant dense<0.000000e+00> : vector<128x128xf32>
    %14 = tpu.matmul %12, %13, %cst_7 {dimension_numbers = #tpu.dot_dimension_numbers<[1], [1], [0], [0], [0, 0, 1, 0], [], []>} : vector<128x128xbf16>, vector<128x128xbf16>, vector<128x128xf32> -> vector<128x128xf32>
    %cst_8 = arith.constant dense<0xFF800000> : vector<128xf32>
    %15 = vector.multi_reduction <maximumf>, %14, %cst_8 [1] : vector<128x128xf32> to vector<128xf32>
    %16 = vector.shape_cast %15 : vector<128xf32> to vector<128x1xf32>
    %17 = vector.broadcast %16 : vector<128x1xf32> to vector<128x128xf32>
    %18 = arith.subf %14, %17 : vector<128x128xf32>
    %19 = math.exp %18 : vector<128x128xf32>
    %cst_9 = arith.constant dense<0.000000e+00> : vector<128xf32>
    %20 = vector.multi_reduction <add>, %19, %cst_9 [1] : vector<128x128xf32> to vector<128xf32>
    %21 = vector.shape_cast %20 : vector<128xf32> to vector<128x1xf32>
    %22 = tpu.reciprocal %21 {approx = true} : vector<128x1xf32> -> vector<128x1xf32>
    %23 = vector.broadcast %22 : vector<128x1xf32> to vector<128x128xf32>
    %24 = arith.mulf %19, %23 : vector<128x128xf32>
    %25 = arith.truncf %11 : vector<128x128xf32> to vector<128x128xbf16>
    %26 = arith.truncf %24 : vector<128x128xf32> to vector<128x128xbf16>
    %cst_10 = arith.constant dense<0.000000e+00> : vector<128x128xf32>
    %27 = tpu.matmul %25, %26, %cst_10 {dimension_numbers = #tpu.dot_dimension_numbers<[1], [0], [0], [1], [0, 0, 1, 1], [], []>} : vector<128x128xbf16>, vector<128x128xbf16>, vector<128x128xf32> -> vector<128x128xf32>
    %28 = vector.broadcast %2 : f32 to vector<128x128xf32>
    %29 = arith.mulf %28, %27 : vector<128x128xf32>
    %30 = arith.addf %29, %4 : vector<128x128xf32>
    %c0_11 = arith.constant 0 : index
    %c0_12 = arith.constant 0 : index
    %c0_13 = arith.constant 0 : index
    %31 = vector.load %arg5[%c0_11, %c0_12, %c0_13] : memref<2x128x128xf32, #tpu.memory_space<vmem>>, vector<1x128x128xf32>
    %32 = vector.shape_cast %31 : vector<1x128x128xf32> to vector<128x128xf32>
    %33 = vector.shape_cast %30 : vector<128x128xf32> to vector<1x128x128xf32>
    tpu.vector_store %arg5[%c0_11, %c0_12, %c0_13], %33 {strides = array<i32>} : memref<2x128x128xf32, #tpu.memory_space<vmem>>, vector<1x128x128xf32>,
    %c1 = arith.constant 1 : index
    %c0_14 = arith.constant 0 : index
    %c0_15 = arith.constant 0 : index
    %34 = vector.load %arg1[%c1, %c0_14, %c0_15] : memref<2x128x128xf32, #tpu.memory_space<vmem>>, vector<1x128x128xf32>
    %35 = vector.shape_cast %34 : vector<1x128x128xf32> to vector<128x128xf32>
    %36 = arith.truncf %35 : vector<128x128xf32> to vector<128x128xbf16>
    %cst_16 = arith.constant dense<0.000000e+00> : vector<384x128xf32>
    %37 = tpu.matmul %0, %36, %cst_16 {dimension_numbers = #tpu.dot_dimension_numbers<[1], [0], [0], [1], [0, 0, 1, 1], [], []>} : vector<384x128xbf16>, vector<128x128xbf16>, vector<384x128xf32> -> vector<384x128xf32>
    %38 = vector.broadcast %1 : vector<384x1xf32> to vector<384x128xf32>
    %39 = arith.addf %37, %38 : vector<384x128xf32>
    %40 = vector.extract_strided_slice %39 {offsets = [0, 0], sizes = [128, 128], strides = [1, 1]} : vector<384x128xf32> to vector<128x128xf32>
    %41 = vector.extract_strided_slice %39 {offsets = [128, 0], sizes = [128, 128], strides = [1, 1]} : vector<384x128xf32> to vector<128x128xf32>
    %42 = vector.extract_strided_slice %39 {offsets = [256, 0], sizes = [128, 128], strides = [1, 1]} : vector<384x128xf32> to vector<128x128xf32>
    %43 = arith.truncf %40 : vector<128x128xf32> to vector<128x128xbf16>
    %44 = arith.truncf %41 : vector<128x128xf32> to vector<128x128xbf16>
    %cst_17 = arith.constant dense<0.000000e+00> : vector<128x128xf32>
    %45 = tpu.matmul %43, %44, %cst_17 {dimension_numbers = #tpu.dot_dimension_numbers<[1], [1], [0], [0], [0, 0, 1, 0], [], []>} : vector<128x128xbf16>, vector<128x128xbf16>, vector<128x128xf32> -> vector<128x128xf32>
    %cst_18 = arith.constant dense<0xFF800000> : vector<128xf32>
    %46 = vector.multi_reduction <maximumf>, %45, %cst_18 [1] : vector<128x128xf32> to vector<128xf32>
    %47 = vector.shape_cast %46 : vector<128xf32> to vector<128x1xf32>
    %48 = vector.broadcast %47 : vector<128x1xf32> to vector<128x128xf32>
    %49 = arith.subf %45, %48 : vector<128x128xf32>
    %50 = math.exp %49 : vector<128x128xf32>
    %cst_19 = arith.constant dense<0.000000e+00> : vector<128xf32>
    %51 = vector.multi_reduction <add>, %50, %cst_19 [1] : vector<128x128xf32> to vector<128xf32>
    %52 = vector.shape_cast %51 : vector<128xf32> to vector<128x1xf32>
    %53 = tpu.reciprocal %52 {approx = true} : vector<128x1xf32> -> vector<128x1xf32>
    %54 = vector.broadcast %53 : vector<128x1xf32> to vector<128x128xf32>
    %55 = arith.mulf %50, %54 : vector<128x128xf32>
    %56 = arith.truncf %42 : vector<128x128xf32> to vector<128x128xbf16>
    %57 = arith.truncf %55 : vector<128x128xf32> to vector<128x128xbf16>
    %cst_20 = arith.constant dense<0.000000e+00> : vector<128x128xf32>
    %58 = tpu.matmul %56, %57, %cst_20 {dimension_numbers = #tpu.dot_dimension_numbers<[1], [0], [0], [1], [0, 0, 1, 1], [], []>} : vector<128x128xbf16>, vector<128x128xbf16>, vector<128x128xf32> -> vector<128x128xf32>
    %59 = vector.broadcast %2 : f32 to vector<128x128xf32>
    %60 = arith.mulf %59, %58 : vector<128x128xf32>
    %61 = arith.addf %60, %35 : vector<128x128xf32>
    %c1_21 = arith.constant 1 : index
    %c0_22 = arith.constant 0 : index
    %c0_23 = arith.constant 0 : index
    %62 = vector.load %arg5[%c1_21, %c0_22, %c0_23] : memref<2x128x128xf32, #tpu.memory_space<vmem>>, vector<1x128x128xf32>
    %63 = vector.shape_cast %62 : vector<1x128x128xf32> to vector<128x128xf32>
    %64 = vector.shape_cast %61 : vector<128x128xf32> to vector<1x128x128xf32>
    tpu.vector_store %arg5[%c1_21, %c0_22, %c0_23], %64 {strides = array<i32>} : memref<2x128x128xf32, #tpu.memory_space<vmem>>, vector<1x128x128xf32>,
    return
  }
  func.func @transform_0(%arg0: i32) -> (i32, i32, i32) {
    %c0_i32 = arith.constant 0 : i32
    %c0_i32_0 = arith.constant 0 : i32
    %c0_i32_1 = arith.constant 0 : i32
    return %arg0, %c0_i32, %c0_i32_0 : i32, i32, i32
  }
  func.func @transform_1(%arg0: i32) -> (i32, i32) {
    %c0_i32 = arith.constant 0 : i32
    %c0_i32_0 = arith.constant 0 : i32
    %c0_i32_1 = arith.constant 0 : i32
    return %c0_i32, %c0_i32_0 : i32, i32
  }
  func.func @transform_2(%arg0: i32) -> (i32, i32) {
    %c0_i32 = arith.constant 0 : i32
    %c0_i32_0 = arith.constant 0 : i32
    %c0_i32_1 = arith.constant 0 : i32
    return %c0_i32, %c0_i32_0 : i32, i32
  }
  func.func @transform_3(%arg0: i32) -> i32 {
    %c0_i32 = arith.constant 0 : i32
    %c0_i32_0 = arith.constant 0 : i32
    return %c0_i32 : i32
  }
  func.func @transform_4(%arg0: i32) -> (i32, i32, i32) {
    %c0_i32 = arith.constant 0 : i32
    %c0_i32_0 = arith.constant 0 : i32
    %c0_i32_1 = arith.constant 0 : i32
    return %arg0, %c0_i32, %c0_i32_0 : i32, i32, i32
  }
}

</mosaic_0001>

<llo_original>
// kernel: tpu_custom_call.1
$region0: #{tpu_custom_call.1}
  #allocation0 [shape = 'u32[]', space=smem, size = 0x4, offset = 0x4, fixed_abs, tag = 'smem constant byte address 0x4 - core index']
  #allocation1 [shape = 'u32[144,128]{1,0:T(1,128)}', space=vmem, size = 0x12000, scoped, tag = 'internal scratch']
  #allocation2 [shape = 'f32[1]{0:T(128)S(6)}', space=smem, size = 0x200, scoped, tag = 'scoped memory for tpu_custom_call.1']
  %s0 = inlined_call_operand.vmem [shape: f32[2,128,128], index: 0, kind: input, shape index: {}]
  %s1 = inlined_call_operand.hbm [shape: bf16[384,128], index: 1, kind: input, shape index: {}]
  %s2 = inlined_call_operand.vmem [shape: f32[384,1], index: 2, kind: input, shape index: {}]
  %s3 = inlined_call_operand.<no memory space> [shape: f32[1], index: 3, kind: input, shape index: {}]
  %s4 = inlined_call_operand.hbm [shape: f32[2,128,128], index: 4, kind: output, shape index: {}]
  %s5 = sld [smem:[#allocation0]]
  $region30: #{tpu_custom_call.1} parent=0
    _
  %s7 = ssub.s32 1, %s5
  %s8 = scalar_select 0, %s7, %s5
  %9 = sst [smem:[#allocation2]] %s3
  $region1: #{tpu_custom_call.1} parent=0
    #allocation3 [shape = 'u8[98304]{0}', space=vmem, size = 0x18000, scoped, tag = 'input window, operand 1, single buffered']
    #allocation4 [shape = 's32[1]{0}', space=sflag, size = 0x4, scoped, tag = 'scoped memory for tpu_custom_call.1']
    #allocation5 [shape = 's32[1]{0}', space=sflag, size = 0x4, scoped, tag = 'scoped memory for tpu_custom_call.1']
    #allocation6 [shape = 'u8[131072]{0}', space=vmem, size = 0x20000, scoped, tag = 'output window, operand 0, single buffered']
    %10 = vsyncpa [#allocation4], 0
    %11 = vsyncpa [#allocation5], 0
    // Predicated region
    $region2: #{tpu_custom_call.1} parent=1 // pred_check
      _
    $region3: #{tpu_custom_call.1} parent=1 // pred_check_branch
      %13 = sbr.rel (0) target = $region5
    $region4: #{tpu_custom_call.1} parent=1 // pred_region
      _
    $region5: #{tpu_custom_call.1} parent=1 // pred_fallthru
      _
    // Predicated region
    $region6: #{tpu_custom_call.1} parent=1 // pred_check
      _
    $region7: #{tpu_custom_call.1} parent=1 // pred_check_branch
      %15 = sbr.rel (0) target = $region9
    $region8: #{tpu_custom_call.1} parent=1 // pred_region
      %s17 = ssub.s32 3072, 3072
      %18 = vsyncadd [#allocation4], %s17
      %s19 = sshll.u32 [#allocation3], 4
      %s20 = int_to_ptr.vmem [resolvable:$true] %s19
      %25 = dma.hbm_to_vmem [thread:$0]  %s1, 3072, %s20, [#allocation4], 64, 64, 4
    $region9: #{tpu_custom_call.1} parent=1 // pred_fallthru
      _
    // Predicated region
    $region10: #{tpu_custom_call.1} parent=1 // pred_check
      _
    $region11: #{tpu_custom_call.1} parent=1 // pred_check_branch
      %27 = sbr.rel (0) target = $region13
    $region12: #{tpu_custom_call.1} parent=1 // pred_region
      _
    $region13: #{tpu_custom_call.1} parent=1 // pred_fallthru
      _
    // Predicated region
    $region14: #{tpu_custom_call.1} parent=1 // pred_check
      _
    $region15: #{tpu_custom_call.1} parent=1 // pred_check_branch
      %29 = sbr.rel (0) target = $region17
    $region16: #{tpu_custom_call.1} parent=1 // pred_region
      _
    $region17: #{tpu_custom_call.1} parent=1 // pred_fallthru
      _
    // Predicated region
    $region18: #{tpu_custom_call.1} parent=1 // pred_check
      _
    $region19: #{tpu_custom_call.1} parent=1 // pred_check_branch
      %31 = sbr.rel (0) target = $region21
    $region20: #{tpu_custom_call.1} parent=1 // pred_region
      %32 = dma.done [#allocation4], 3072
    $region21: #{tpu_custom_call.1} parent=1 // pred_fallthru
      _
    %v34 = vld [vmem:[#allocation3] sm:$0xf]
    %v35 = vld [vmem:[#allocation3 + $0x4] sm:$0xf]
    %v36 = vld [vmem:[#allocation3 + $0x8] sm:$0xf]
    %v37 = vld [vmem:[#allocation3 + $0xc] sm:$0xf]
    %v38 = vld [vmem:[#allocation3 + $0x10] sm:$0xf]
    %v39 = vld [vmem:[#allocation3 + $0x14] sm:$0xf]
    %v40 = vld [vmem:[#allocation3 + $0x18] sm:$0xf]
    %v41 = vld [vmem:[#allocation3 + $0x1c] sm:$0xf]
    %v42 = vld [vmem:[#allocation3 + $0x20] sm:$0xf]
    %v43 = vld [vmem:[#allocation3 + $0x24] sm:$0xf]
    %v44 = vld [vmem:[#allocation3 + $0x28] sm:$0xf]
    %v45 = vld [vmem:[#allocation3 + $0x2c] sm:$0xf]
    %v46 = vld [vmem:[#allocation3 + $0x30] sm:$0xf]
    %v47 = vld [vmem:[#allocation3 + $0x34] sm:$0xf]
    %v48 = vld [vmem:[#allocation3 + $0x38] sm:$0xf]
    %v49 = vld [vmem:[#allocation3 + $0x3c] sm:$0xf]
    %v50 = vld [vmem:[#allocation3 + $0x40] sm:$0xf]
    %v51 = vld [vmem:[#allocation3 + $0x44] sm:$0xf]
    %v52 = vld [vmem:[#allocation3 + $0x48] sm:$0xf]
    %v53 = vld [vmem:[#allocation3 + $0x4c] sm:$0xf]
    %v54 = vld [vmem:[#allocation3 + $0x50] sm:$0xf]
    %v55 = vld [vmem:[#allocation3 + $0x54] sm:$0xf]
    %v56 = vld [vmem:[#allocation3 + $0x58] sm:$0xf]
    %v57 = vld [vmem:[#allocation3 + $0x5c] sm:$0xf]
    %v58 = vld [vmem:[#allocation3 + $0x60] sm:$0xf]
    %v59 = vld [vmem:[#allocation3 + $0x64] sm:$0xf]
    %v60 = vld [vmem:[#allocation3 + $0x68] sm:$0xf]
    %v61 = vld [vmem:[#allocation3 + $0x6c] sm:$0xf]
    %v62 = vld [vmem:[#allocation3 + $0x70] sm:$0xf]
    %v63 = vld [vmem:[#allocation3 + $0x74] sm:$0xf]
    %v64 = vld [vmem:[#allocation3 + $0x78] sm:$0xf]
    %v65 = vld [vmem:[#allocation3 + $0x7c] sm:$0xf]
    %v66 = vld [vmem:[#allocation3 + $0x80] sm:$0xf]
    %v67 = vld [vmem:[#allocation3 + $0x84] sm:$0xf]
    %v68 = vld [vmem:[#allocation3 + $0x88] sm:$0xf]
    %v69 = vld [vmem:[#allocation3 + $0x8c] sm:$0xf]
    %v70 = vld [vmem:[#allocation3 + $0x90] sm:$0xf]
    %v71 = vld [vmem:[#allocation3 + $0x94] sm:$0xf]
    %v72 = vld [vmem:[#allocation3 + $0x98] sm:$0xf]
    %v73 = vld [vmem:[#allocation3 + $0x9c] sm:$0xf]
    %v74 = vld [vmem:[#allocation3 + $0xa0] sm:$0xf]
    %v75 = vld [vmem:[#allocation3 + $0xa4] sm:$0xf]
    %v76 = vld [vmem:[#allocation3 + $0xa8] sm:$0xf]
    %v77 = vld [vmem:[#allocation3 + $0xac] sm:$0xf]
    %v78 = vld [vmem:[#allocation3 + $0xb0] sm:$0xf]
    %v79 = vld [vmem:[#allocation3 + $0xb4] sm:$0xf]
    %v80 = vld [vmem:[#allocation3 + $0xb8] sm:$0xf]
    %v81 = vld [vmem:[#allocation3 + $0xbc] sm:$0xf]
    %v82 = vld [vmem:[%s2] sm:$0xff]
    %v83 = vld [vmem:[%s2 + $0x8] sm:$0xff]
    %v84 = vld [vmem:[%s2 + $0x10] sm:$0xff]
    %v85 = vld [vmem:[%s2 + $0x18] sm:$0xff]
    %v86 = vld [vmem:[%s2 + $0x20] sm:$0xff]
    %v87 = vld [vmem:[%s2 + $0x28] sm:$0xff]
    %v88 = vld [vmem:[%s2 + $0x30] sm:$0xff]
    %v89 = vld [vmem:[%s2 + $0x38] sm:$0xff]
    %v90 = vld [vmem:[%s2 + $0x40] sm:$0xff]
    %v91 = vld [vmem:[%s2 + $0x48] sm:$0xff]
    %v92 = vld [vmem:[%s2 + $0x50] sm:$0xff]
    %v93 = vld [vmem:[%s2 + $0x58] sm:$0xff]
    %v94 = vld [vmem:[%s2 + $0x60] sm:$0xff]
    %v95 = vld [vmem:[%s2 + $0x68] sm:$0xff]
    %v96 = vld [vmem:[%s2 + $0x70] sm:$0xff]
    %v97 = vld [vmem:[%s2 + $0x78] sm:$0xff]
    %v98 = vld [vmem:[%s2 + $0x80] sm:$0xff]
    %v99 = vld [vmem:[%s2 + $0x88] sm:$0xff]
    %v100 = vld [vmem:[%s2 + $0x90] sm:$0xff]
    %v101 = vld [vmem:[%s2 + $0x98] sm:$0xff]
    %v102 = vld [vmem:[%s2 + $0xa0] sm:$0xff]
    %v103 = vld [vmem:[%s2 + $0xa8] sm:$0xff]
    %v104 = vld [vmem:[%s2 + $0xb0] sm:$0xff]
    %v105 = vld [vmem:[%s2 + $0xb8] sm:$0xff]
    %v106 = vld [vmem:[%s2 + $0xc0] sm:$0xff]
    %v107 = vld [vmem:[%s2 + $0xc8] sm:$0xff]
    %v108 = vld [vmem:[%s2 + $0xd0] sm:$0xff]
    %v109 = vld [vmem:[%s2 + $0xd8] sm:$0xff]
    %v110 = vld [vmem:[%s2 + $0xe0] sm:$0xff]
    %v111 = vld [vmem:[%s2 + $0xe8] sm:$0xff]
    %v112 = vld [vmem:[%s2 + $0xf0] sm:$0xff]
    %v113 = vld [vmem:[%s2 + $0xf8] sm:$0xff]
    %v114 = vld [vmem:[%s2 + $0x100] sm:$0xff]
    %v115 = vld [vmem:[%s2 + $0x108] sm:$0xff]
    %v116 = vld [vmem:[%s2 + $0x110] sm:$0xff]
    %v117 = vld [vmem:[%s2 + $0x118] sm:$0xff]
    %v118 = vld [vmem:[%s2 + $0x120] sm:$0xff]
    %v119 = vld [vmem:[%s2 + $0x128] sm:$0xff]
    %v120 = vld [vmem:[%s2 + $0x130] sm:$0xff]
    %v121 = vld [vmem:[%s2 + $0x138] sm:$0xff]
    %v122 = vld [vmem:[%s2 + $0x140] sm:$0xff]
    %v123 = vld [vmem:[%s2 + $0x148] sm:$0xff]
    %v124 = vld [vmem:[%s2 + $0x150] sm:$0xff]
    %v125 = vld [vmem:[%s2 + $0x158] sm:$0xff]
    %v126 = vld [vmem:[%s2 + $0x160] sm:$0xff]
    %v127 = vld [vmem:[%s2 + $0x168] sm:$0xff]
    %v128 = vld [vmem:[%s2 + $0x170] sm:$0xff]
    %v129 = vld [vmem:[%s2 + $0x178] sm:$0xff]
    %s130 = sld [smem:[#allocation2]]
    %v131 = vld [vmem:[%s0] sm:$0xff]
    %v132 = vld [vmem:[%s0 + $0x8] sm:$0xff]
    %v133 = vld [vmem:[%s0 + $0x10] sm:$0xff]
    %v134 = vld [vmem:[%s0 + $0x18] sm:$0xff]
    %v135 = vld [vmem:[%s0 + $0x20] sm:$0xff]
    %v136 = vld [vmem:[%s0 + $0x28] sm:$0xff]
    %v137 = vld [vmem:[%s0 + $0x30] sm:$0xff]
    %v138 = vld [vmem:[%s0 + $0x38] sm:$0xff]
    %v139 = vld [vmem:[%s0 + $0x40] sm:$0xff]
    %v140 = vld [vmem:[%s0 + $0x48] sm:$0xff]
    %v141 = vld [vmem:[%s0 + $0x50] sm:$0xff]
    %v142 = vld [vmem:[%s0 + $0x58] sm:$0xff]
    %v143 = vld [vmem:[%s0 + $0x60] sm:$0xff]
    %v144 = vld [vmem:[%s0 + $0x68] sm:$0xff]
    %v145 = vld [vmem:[%s0 + $0x70] sm:$0xff]
    %v146 = vld [vmem:[%s0 + $0x78] sm:$0xff]
    %v147 = vpack.c.bf16 %v132, %v131
    %v148 = vpack.c.bf16 %v134, %v133
    %v149 = vpack.c.bf16 %v136, %v135
    %v150 = vpack.c.bf16 %v138, %v137
    %v151 = vpack.c.bf16 %v140, %v139
    %v152 = vpack.c.bf16 %v142, %v141
    %v153 = vpack.c.bf16 %v144, %v143
    %v154 = vpack.c.bf16 %v146, %v145
    %156 = vset.pattern.permute.xlu0 0
    %157 = vperm.xlu0 %156, %v82
    %v158 = vpop.permute.xlu0 %157
    %161 = vset.pattern.permute.xlu0 0
    %162 = vperm.xlu0 %161, %v83
    %v163 = vpop.permute.xlu0 %162
    %166 = vset.pattern.permute.xlu0 0
    %167 = vperm.xlu0 %166, %v84
    %v168 = vpop.permute.xlu0 %167
    %171 = vset.pattern.permute.xlu0 0
    %172 = vperm.xlu0 %171, %v85
    %v173 = vpop.permute.xlu0 %172
    %176 = vset.pattern.permute.xlu0 0
    %177 = vperm.xlu0 %176, %v86
    %v178 = vpop.permute.xlu0 %177
    %181 = vset.pattern.permute.xlu0 0
    %182 = vperm.xlu0 %181, %v87
    %v183 = vpop.permute.xlu0 %182
    %186 = vset.pattern.permute.xlu0 0
    %187 = vperm.xlu0 %186, %v88
    %v188 = vpop.permute.xlu0 %187
    %191 = vset.pattern.permute.xlu0 0
    %192 = vperm.xlu0 %191, %v89
    %v193 = vpop.permute.xlu0 %192
    %196 = vset.pattern.permute.xlu0 0
    %197 = vperm.xlu0 %196, %v90
    %v198 = vpop.permute.xlu0 %197
    %201 = vset.pattern.permute.xlu0 0
    %202 = vperm.xlu0 %201, %v91
    %v203 = vpop.permute.xlu0 %202
    %206 = vset.pattern.permute.xlu0 0
    %207 = vperm.xlu0 %206, %v92
    %v208 = vpop.permute.xlu0 %207
    %211 = vset.pattern.permute.xlu0 0
    %212 = vperm.xlu0 %211, %v93
    %v213 = vpop.permute.xlu0 %212
    %216 = vset.pattern.permute.xlu0 0
    %217 = vperm.xlu0 %216, %v94
    %v218 = vpop.permute.xlu0 %217
    %221 = vset.pattern.permute.xlu0 0
    %222 = vperm.xlu0 %221, %v95
    %v223 = vpop.permute.xlu0 %222
    %226 = vset.pattern.permute.xlu0 0
    %227 = vperm.xlu0 %226, %v96
    %v228 = vpop.permute.xlu0 %227
    %231 = vset.pattern.permute.xlu0 0
    %232 = vperm.xlu0 %231, %v97
    %v233 = vpop.permute.xlu0 %232
    %236 = vset.pattern.permute.xlu0 0
    %237 = vperm.xlu0 %236, %v98
    %v238 = vpop.permute.xlu0 %237
    %241 = vset.pattern.permute.xlu0 0
    %242 = vperm.xlu0 %241, %v99
    %v243 = vpop.permute.xlu0 %242
    %246 = vset.pattern.permute.xlu0 0
    %247 = vperm.xlu0 %246, %v100
    %v248 = vpop.permute.xlu0 %247
    %251 = vset.pattern.permute.xlu0 0
    %252 = vperm.xlu0 %251, %v101
    %v253 = vpop.permute.xlu0 %252
    %256 = vset.pattern.permute.xlu0 0
    %257 = vperm.xlu0 %256, %v102
    %v258 = vpop.permute.xlu0 %257
    %261 = vset.pattern.permute.xlu0 0
    %262 = vperm.xlu0 %261, %v103
    %v263 = vpop.permute.xlu0 %262
    %266 = vset.pattern.permute.xlu0 0
    %267 = vperm.xlu0 %266, %v104
    %v268 = vpop.permute.xlu0 %267
    %271 = vset.pattern.permute.xlu0 0
    %272 = vperm.xlu0 %271, %v105
    %v273 = vpop.permute.xlu0 %272
    %276 = vset.pattern.permute.xlu0 0
    %277 = vperm.xlu0 %276, %v106
    %v278 = vpop.permute.xlu0 %277
    %281 = vset.pattern.permute.xlu0 0
    %282 = vperm.xlu0 %281, %v107
    %v283 = vpop.permute.xlu0 %282
    %286 = vset.pattern.permute.xlu0 0
    %287 = vperm.xlu0 %286, %v108
    %v288 = vpop.permute.xlu0 %287
    %291 = vset.pattern.permute.xlu0 0
    %292 = vperm.xlu0 %291, %v109
    %v293 = vpop.permute.xlu0 %292
    %296 = vset.pattern.permute.xlu0 0
    %297 = vperm.xlu0 %296, %v110
    %v298 = vpop.permute.xlu0 %297
    %301 = vset.pattern.permute.xlu0 0
    %302 = vperm.xlu0 %301, %v111
    %v303 = vpop.permute.xlu0 %302
    %306 = vset.pattern.permute.xlu0 0
    %307 = vperm.xlu0 %306, %v112
    %v308 = vpop.permute.xlu0 %307
    %311 = vset.pattern.permute.xlu0 0
    %312 = vperm.xlu0 %311, %v113
    %v313 = vpop.permute.xlu0 %312
    %316 = vset.pattern.permute.xlu0 0
    %317 = vperm.xlu0 %316, %v114
    %v318 = vpop.permute.xlu0 %317
    %321 = vset.pattern.permute.xlu0 0
    %322 = vperm.xlu0 %321, %v115
    %v323 = vpop.permute.xlu0 %322
    %326 = vset.pattern.permute.xlu0 0
    %327 = vperm.xlu0 %326, %v116
    %v328 = vpop.permute.xlu0 %327
    %331 = vset.pattern.permute.xlu0 0
    %332 = vperm.xlu0 %331, %v117
    %v333 = vpop.permute.xlu0 %332
    %336 = vset.pattern.permute.xlu0 0
    %337 = vperm.xlu0 %336, %v118
    %v338 = vpop.permute.xlu0 %337
    %341 = vset.pattern.permute.xlu0 0
    %342 = vperm.xlu0 %341, %v119
    %v343 = vpop.permute.xlu0 %342
    %346 = vset.pattern.permute.xlu0 0
    %347 = vperm.xlu0 %346, %v120
    %v348 = vpop.permute.xlu0 %347
    %351 = vset.pattern.permute.xlu0 0
    %352 = vperm.xlu0 %351, %v121
    %v353 = vpop.permute.xlu0 %352
    %356 = vset.pattern.permute.xlu0 0
    %357 = vperm.xlu0 %356, %v122
    %v358 = vpop.permute.xlu0 %357
    %361 = vset.pattern.permute.xlu0 0
    %362 = vperm.xlu0 %361, %v123
    %v363 = vpop.permute.xlu0 %362
    %366 = vset.pattern.permute.xlu0 0
    %367 = vperm.xlu0 %366, %v124
    %v368 = vpop.permute.xlu0 %367
    %371 = vset.pattern.permute.xlu0 0
    %372 = vperm.xlu0 %371, %v125
    %v373 = vpop.permute.xlu0 %372
    %376 = vset.pattern.permute.xlu0 0
    %377 = vperm.xlu0 %376, %v126
    %v378 = vpop.permute.xlu0 %377
    %381 = vset.pattern.permute.xlu0 0
    %382 = vperm.xlu0 %381, %v127
    %v383 = vpop.permute.xlu0 %382
    %386 = vset.pattern.permute.xlu0 0
    %387 = vperm.xlu0 %386, %v128
    %v388 = vpop.permute.xlu0 %387
    %391 = vset.pattern.permute.xlu0 0
    %392 = vperm.xlu0 %391, %v129
    %v393 = vpop.permute.xlu0 %392
    %v443 = vunpack.c.l.b16 %v34
    %v444 = vunpack.c.l.b16 %v35
    %v445 = vunpack.c.l.b16 %v36
    %v446 = vunpack.c.l.b16 %v37
    %v447 = vunpack.c.l.b16 %v38
    %v448 = vunpack.c.l.b16 %v39
    %v449 = vunpack.c.l.b16 %v40
    %v450 = vunpack.c.l.b16 %v41
    %v451 = vunpack.c.l.b16 %v42
    %v452 = vunpack.c.l.b16 %v43
    %v453 = vunpack.c.l.b16 %v44
    %v454 = vunpack.c.l.b16 %v45
    %v455 = vunpack.c.l.b16 %v46
    %v456 = vunpack.c.l.b16 %v47
    %v457 = vunpack.c.l.b16 %v48
    %v458 = vunpack.c.l.b16 %v49
    %v459 = vunpack.c.l.b16 %v50
    %v460 = vunpack.c.l.b16 %v51
    %v461 = vunpack.c.l.b16 %v52
    %v462 = vunpack.c.l.b16 %v53
    %v463 = vunpack.c.l.b16 %v54
    %v464 = vunpack.c.l.b16 %v55
    %v465 = vunpack.c.l.b16 %v56
    %v466 = vunpack.c.l.b16 %v57
    %v467 = vunpack.c.l.b16 %v58
    %v468 = vunpack.c.l.b16 %v59
    %v469 = vunpack.c.l.b16 %v60
    %v470 = vunpack.c.l.b16 %v61
    %v471 = vunpack.c.l.b16 %v62
    %v472 = vunpack.c.l.b16 %v63
    %v473 = vunpack.c.l.b16 %v64
    %v474 = vunpack.c.l.b16 %v65
    %v475 = vunpack.c.l.b16 %v66
    %v476 = vunpack.c.l.b16 %v67
    %v477 = vunpack.c.l.b16 %v68
    %v478 = vunpack.c.l.b16 %v69
    %v479 = vunpack.c.l.b16 %v70
    %v480 = vunpack.c.l.b16 %v71
    %v481 = vunpack.c.l.b16 %v72
    %v482 = vunpack.c.l.b16 %v73
    %v483 = vunpack.c.l.b16 %v74
    %v484 = vunpack.c.l.b16 %v75
    %v485 = vunpack.c.l.b16 %v76
    %v486 = vunpack.c.l.b16 %v77
    %v487 = vunpack.c.l.b16 %v78
    %v488 = vunpack.c.l.b16 %v79
    %v489 = vunpack.c.l.b16 %v80
    %v490 = vunpack.c.l.b16 %v81
    %v491 = vpack.c.b16 %v444, %v443
    %v492 = vpack.c.b16 %v446, %v445
    %v493 = vpack.c.b16 %v448, %v447
    %v494 = vpack.c.b16 %v450, %v449
    %v495 = vpack.c.b16 %v452, %v451
    %v496 = vpack.c.b16 %v454, %v453
    %v497 = vpack.c.b16 %v456, %v455
    %v498 = vpack.c.b16 %v458, %v457
    %v499 = vpack.c.b16 %v460, %v459
    %v500 = vpack.c.b16 %v462, %v461
    %v501 = vpack.c.b16 %v464, %v463
    %v502 = vpack.c.b16 %v466, %v465
    %v503 = vpack.c.b16 %v468, %v467
    %v504 = vpack.c.b16 %v470, %v469
    %v505 = vpack.c.b16 %v472, %v471
    %v506 = vpack.c.b16 %v474, %v473
    %v507 = vpack.c.b16 %v476, %v475
    %v508 = vpack.c.b16 %v478, %v477
    %v509 = vpack.c.b16 %v480, %v479
    %v510 = vpack.c.b16 %v482, %v481
    %v511 = vpack.c.b16 %v484, %v483
    %v512 = vpack.c.b16 %v486, %v485
    %v513 = vpack.c.b16 %v488, %v487
    %v514 = vpack.c.b16 %v490, %v489
    %539 = vmatprep.subr.bf16.mxu0 0
    %540 = vmatpush1.bf16.msra.mxu0 %v154
    %541 = vmatprep.subr.bf16.mxu0 0
    %542 = vmatpush1.bf16.msra.mxu0 %v153
    %543 = vmatprep.subr.bf16.mxu0 0
    %544 = vmatpush1.bf16.msra.mxu0 %v152
    %545 = vmatprep.subr.bf16.mxu0 0
    %546 = vmatpush1.bf16.msra.mxu0 %v151
    %547 = vmatprep.subr.bf16.mxu0 0
    %548 = vmatpush1.bf16.msra.mxu0 %v150
    %549 = vmatprep.subr.bf16.mxu0 0
    %550 = vmatpush1.bf16.msra.mxu0 %v149
    %551 = vmatprep.subr.bf16.mxu0 0
    %552 = vmatpush1.bf16.msra.mxu0 %v148
    %553 = vmatprep.subr.bf16.mxu0 0
    %554 = vmatpush1.bf16.msra.mxu0 %v147
    %555 = vmatprep.subr.bf16.mxu0 0
    %556 = vmatpush2.bf16.msra.mxu0 0
    %557 = vmatprep.subr.bf16.mxu0 0
    %558 = vmatpush2.bf16.msra.mxu0 0
    %559 = vmatprep.subr.bf16.mxu0 0
    %560 = vmatpush2.bf16.msra.mxu0 0
    %561 = vmatprep.subr.bf16.mxu0 0
    %562 = vmatpush2.bf16.msra.mxu0 0
    %563 = vmatprep.subr.bf16.mxu0 0
    %564 = vmatpush2.bf16.msra.mxu0 0
    %565 = vmatprep.subr.bf16.mxu0 0
    %566 = vmatpush2.bf16.msra.mxu0 0
    %567 = vmatprep.subr.bf16.mxu0 0
    %568 = vmatpush2.bf16.msra.mxu0 0
    %569 = vmatprep.subr.bf16.mxu0 0
    %570 = vmatpush2.bf16.msra.mxu0 0
    %571 = vmatprep.mubr.bf16.mxu0 0
    %572 = vmatmul.mubr.bf16.gmra.mxu0 %v491
    %v573 = vpop.f32.mrf.mxu0
    %v574 = vadd.f32 %v158, %v573
    %v575 = vpop.f32.mrf.mxu0
    %v576 = vpop.f32.mrf.mxu0
    %v577 = vadd.f32 %v163, %v576
    %v578 = vpop.f32.mrf.mxu0
    %579 = vmatprep.mubr.bf16.mxu0 0
    %580 = vmatmul.mubr.bf16.gmra.mxu0 %v492
    %v581 = vpop.f32.mrf.mxu0
    %v582 = vadd.f32 %v168, %v581
    %v583 = vpop.f32.mrf.mxu0
    %v584 = vpop.f32.mrf.mxu0
    %v585 = vadd.f32 %v173, %v584
    %v586 = vpop.f32.mrf.mxu0
    %587 = vmatprep.mubr.bf16.mxu0 0
    %588 = vmatmul.mubr.bf16.gmra.mxu0 %v493
    %v589 = vpop.f32.mrf.mxu0
    %v590 = vadd.f32 %v178, %v589
    %v591 = vpop.f32.mrf.mxu0
    %v592 = vpop.f32.mrf.mxu0
    %v593 = vadd.f32 %v183, %v592
    %v594 = vpop.f32.mrf.mxu0
    %595 = vmatprep.mubr.bf16.mxu0 0
    %596 = vmatmul.mubr.bf16.gmra.mxu0 %v494
    %v597 = vpop.f32.mrf.mxu0
    %v598 = vadd.f32 %v188, %v597
    %v599 = vpop.f32.mrf.mxu0
    %v600 = vpop.f32.mrf.mxu0
    %v601 = vadd.f32 %v193, %v600
    %v602 = vpop.f32.mrf.mxu0
    %603 = vmatprep.mubr.bf16.mxu0 0
    %604 = vmatmul.mubr.bf16.gmra.mxu0 %v495
    %v605 = vpop.f32.mrf.mxu0
    %v606 = vadd.f32 %v198, %v605
    %v607 = vpop.f32.mrf.mxu0
    %v608 = vpop.f32.mrf.mxu0
    %v609 = vadd.f32 %v203, %v608
    %v610 = vpop.f32.mrf.mxu0
    %611 = vmatprep.mubr.bf16.mxu0 0
    %612 = vmatmul.mubr.bf16.gmra.mxu0 %v496
    %v613 = vpop.f32.mrf.mxu0
    %v614 = vadd.f32 %v208, %v613
    %v615 = vpop.f32.mrf.mxu0
    %v616 = vpop.f32.mrf.mxu0
    %v617 = vadd.f32 %v213, %v616
    %v618 = vpop.f32.mrf.mxu0
    %619 = vmatprep.mubr.bf16.mxu0 0
    %620 = vmatmul.mubr.bf16.gmra.mxu0 %v497
    %v621 = vpop.f32.mrf.mxu0
    %v622 = vadd.f32 %v218, %v621
    %v623 = vpop.f32.mrf.mxu0
    %v624 = vpop.f32.mrf.mxu0
    %v625 = vadd.f32 %v223, %v624
    %v626 = vpop.f32.mrf.mxu0
    %627 = vmatprep.mubr.bf16.mxu0 0
    %628 = vmatmul.mubr.bf16.gmra.mxu0 %v498
    %v629 = vpop.f32.mrf.mxu0
    %v630 = vadd.f32 %v228, %v629
    %v631 = vpop.f32.mrf.mxu0
    %v632 = vpop.f32.mrf.mxu0
    %v633 = vadd.f32 %v233, %v632
    %v634 = vpop.f32.mrf.mxu0
    %635 = vmatprep.mubr.bf16.mxu0 0
    %636 = vmatmul.mubr.bf16.gmra.mxu0 %v499
    %v637 = vpop.f32.mrf.mxu0
    %v638 = vadd.f32 %v238, %v637
    %v639 = vpop.f32.mrf.mxu0
    %v640 = vpop.f32.mrf.mxu0
    %v641 = vadd.f32 %v243, %v640
    %v642 = vpop.f32.mrf.mxu0
    %643 = vmatprep.mubr.bf16.mxu0 0
    %644 = vmatmul.mubr.bf16.gmra.mxu0 %v500
    %v645 = vpop.f32.mrf.mxu0
    %v646 = vadd.f32 %v248, %v645
    %v647 = vpop.f32.mrf.mxu0
    %v648 = vpop.f32.mrf.mxu0
    %v649 = vadd.f32 %v253, %v648
    %v650 = vpop.f32.mrf.mxu0
    %651 = vmatprep.mubr.bf16.mxu0 0
    %652 = vmatmul.mubr.bf16.gmra.mxu0 %v501
    %v653 = vpop.f32.mrf.mxu0
    %v654 = vadd.f32 %v258, %v653
    %v655 = vpop.f32.mrf.mxu0
    %v656 = vpop.f32.mrf.mxu0
    %v657 = vadd.f32 %v263, %v656
    %v658 = vpop.f32.mrf.mxu0
    %659 = vmatprep.mubr.bf16.mxu0 0
    %660 = vmatmul.mubr.bf16.gmra.mxu0 %v502
    %v661 = vpop.f32.mrf.mxu0
    %v662 = vadd.f32 %v268, %v661
    %v663 = vpop.f32.mrf.mxu0
    %v664 = vpop.f32.mrf.mxu0
    %v665 = vadd.f32 %v273, %v664
    %v666 = vpop.f32.mrf.mxu0
    %667 = vmatprep.mubr.bf16.mxu0 0
    %668 = vmatmul.mubr.bf16.gmra.mxu0 %v503
    %v669 = vpop.f32.mrf.mxu0
    %v670 = vadd.f32 %v278, %v669
    %v671 = vpop.f32.mrf.mxu0
    %v672 = vpop.f32.mrf.mxu0
    %v673 = vadd.f32 %v283, %v672
    %v674 = vpop.f32.mrf.mxu0
    %675 = vmatprep.mubr.bf16.mxu0 0
    %676 = vmatmul.mubr.bf16.gmra.mxu0 %v504
    %v677 = vpop.f32.mrf.mxu0
    %v678 = vadd.f32 %v288, %v677
    %v679 = vpop.f32.mrf.mxu0
    %v680 = vpop.f32.mrf.mxu0
    %v681 = vadd.f32 %v293, %v680
    %v682 = vpop.f32.mrf.mxu0
    %683 = vmatprep.mubr.bf16.mxu0 0
    %684 = vmatmul.mubr.bf16.gmra.mxu0 %v505
    %v685 = vpop.f32.mrf.mxu0
    %v686 = vadd.f32 %v298, %v685
    %v687 = vpop.f32.mrf.mxu0
    %v688 = vpop.f32.mrf.mxu0
    %v689 = vadd.f32 %v303, %v688
    %v690 = vpop.f32.mrf.mxu0
    %691 = vmatprep.mubr.bf16.mxu0 0
    %692 = vmatmul.mubr.bf16.gmra.mxu0 %v506
    %v693 = vpop.f32.mrf.mxu0
    %v694 = vadd.f32 %v308, %v693
    %v695 = vpop.f32.mrf.mxu0
    %v696 = vpop.f32.mrf.mxu0
    %v697 = vadd.f32 %v313, %v696
    %v698 = vpop.f32.mrf.mxu0
    %699 = vmatprep.mubr.bf16.mxu0 0
    %700 = vmatmul.mubr.bf16.gmra.mxu0 %v507
    %v701 = vpop.f32.mrf.mxu0
    %v702 = vadd.f32 %v318, %v701
    %v703 = vpop.f32.mrf.mxu0
    %v704 = vpop.f32.mrf.mxu0
    %v705 = vadd.f32 %v323, %v704
    %v706 = vpop.f32.mrf.mxu0
    %707 = vmatprep.mubr.bf16.mxu0 0
    %708 = vmatmul.mubr.bf16.gmra.mxu0 %v508
    %v709 = vpop.f32.mrf.mxu0
    %v710 = vadd.f32 %v328, %v709
    %v711 = vpop.f32.mrf.mxu0
    %v712 = vpop.f32.mrf.mxu0
    %v713 = vadd.f32 %v333, %v712
    %v714 = vpop.f32.mrf.mxu0
    %715 = vmatprep.mubr.bf16.mxu0 0
    %716 = vmatmul.mubr.bf16.gmra.mxu0 %v509
    %v717 = vpop.f32.mrf.mxu0
    %v718 = vadd.f32 %v338, %v717
    %v719 = vpop.f32.mrf.mxu0
    %v720 = vpop.f32.mrf.mxu0
    %v721 = vadd.f32 %v343, %v720
    %v722 = vpop.f32.mrf.mxu0
    %723 = vmatprep.mubr.bf16.mxu0 0
    %724 = vmatmul.mubr.bf16.gmra.mxu0 %v510
    %v725 = vpop.f32.mrf.mxu0
    %v726 = vadd.f32 %v348, %v725
    %v727 = vpop.f32.mrf.mxu0
    %v728 = vpop.f32.mrf.mxu0
    %v729 = vadd.f32 %v353, %v728
    %v730 = vpop.f32.mrf.mxu0
    %731 = vmatprep.mubr.bf16.mxu0 0
    %732 = vmatmul.mubr.bf16.gmra.mxu0 %v511
    %v733 = vpop.f32.mrf.mxu0
    %v734 = vadd.f32 %v358, %v733
    %v735 = vpop.f32.mrf.mxu0
    %v736 = vpop.f32.mrf.mxu0
    %v737 = vadd.f32 %v363, %v736
    %v738 = vpop.f32.mrf.mxu0
    %739 = vmatprep.mubr.bf16.mxu0 0
    %740 = vmatmul.mubr.bf16.gmra.mxu0 %v512
    %v741 = vpop.f32.mrf.mxu0
    %v742 = vadd.f32 %v368, %v741
    %v743 = vpop.f32.mrf.mxu0
    %v744 = vpop.f32.mrf.mxu0
    %v745 = vadd.f32 %v373, %v744
    %v746 = vpop.f32.mrf.mxu0
    %747 = vmatprep.mubr.bf16.mxu0 0
    %748 = vmatmul.mubr.bf16.gmra.mxu0 %v513
    %v749 = vpop.f32.mrf.mxu0
    %v750 = vadd.f32 %v378, %v749
    %v751 = vpop.f32.mrf.mxu0
    %v752 = vpop.f32.mrf.mxu0
    %v753 = vadd.f32 %v383, %v752
    %v754 = vpop.f32.mrf.mxu0
    %755 = vmatprep.mubr.bf16.mxu0 0
    %756 = vmatmul.mubr.bf16.gmra.mxu0 %v514
    %v757 = vpop.f32.mrf.mxu0
    %v758 = vadd.f32 %v388, %v757
    %v759 = vpop.f32.mrf.mxu0
    %v760 = vpop.f32.mrf.mxu0
    %v761 = vadd.f32 %v393, %v760
    %v762 = vpop.f32.mrf.mxu0
    %763 = vdwg.mxu0
    %v764 = vpack.c.bf16 %v577, %v574
    %v765 = vpack.c.bf16 %v585, %v582
    %v766 = vpack.c.bf16 %v593, %v590
    %v767 = vpack.c.bf16 %v601, %v598
    %v768 = vpack.c.bf16 %v609, %v606
    %v769 = vpack.c.bf16 %v617, %v614
    %v770 = vpack.c.bf16 %v625, %v622
    %v771 = vpack.c.bf16 %v633, %v630
    %v772 = vpack.c.bf16 %v641, %v638
    %v773 = vpack.c.bf16 %v649, %v646
    %v774 = vpack.c.bf16 %v657, %v654
    %v775 = vpack.c.bf16 %v665, %v662
    %v776 = vpack.c.bf16 %v673, %v670
    %v777 = vpack.c.bf16 %v681, %v678
    %v778 = vpack.c.bf16 %v689, %v686
    %v779 = vpack.c.bf16 %v697, %v694
    %780 = vmatprep.subr.bf16.mxu0 0
    %781 = vmatpush1.bf16.xpose.msra.mxu0 %v779
    %782 = vmatprep.subr.bf16.mxu0 0
    %783 = vmatpush1.bf16.xpose.msra.mxu0 %v778
    %784 = vmatprep.subr.bf16.mxu0 0
    %785 = vmatpush1.bf16.xpose.msra.mxu0 %v777
    %786 = vmatprep.subr.bf16.mxu0 0
    %787 = vmatpush1.bf16.xpose.msra.mxu0 %v776
    %788 = vmatprep.subr.bf16.mxu0 0
    %789 = vmatpush1.bf16.xpose.msra.mxu0 %v775
    %790 = vmatprep.subr.bf16.mxu0 0
    %791 = vmatpush1.bf16.xpose.msra.mxu0 %v774
    %792 = vmatprep.subr.bf16.mxu0 0
    %793 = vmatpush1.bf16.xpose.msra.mxu0 %v773
    %794 = vmatprep.subr.bf16.mxu0 0
    %795 = vmatpush1.bf16.xpose.msra.mxu0 %v772
    %796 = vmatprep.subr.bf16.mxu0 0
    %797 = vmatpush2.bf16.xpose.msra.mxu0 0
    %798 = vmatprep.subr.bf16.mxu0 0
    %799 = vmatpush2.bf16.xpose.msra.mxu0 0
    %800 = vmatprep.subr.bf16.mxu0 0
    %801 = vmatpush2.bf16.xpose.msra.mxu0 0
    %802 = vmatprep.subr.bf16.mxu0 0
    %803 = vmatpush2.bf16.xpose.msra.mxu0 0
    %804 = vmatprep.subr.bf16.mxu0 0
    %805 = vmatpush2.bf16.xpose.msra.mxu0 0
    %806 = vmatprep.subr.bf16.mxu0 0
    %807 = vmatpush2.bf16.xpose.msra.mxu0 0
    %808 = vmatprep.subr.bf16.mxu0 0
    %809 = vmatpush2.bf16.xpose.msra.mxu0 0
    %810 = vmatprep.subr.bf16.mxu0 0
    %811 = vmatpush2.bf16.xpose.msra.mxu0 0
    %812 = vmatprep.mubr.bf16.mxu0 0
    %813 = vmatmul.mubr.bf16.gmra.mxu0 %v764
    %v814 = vpop.f32.mrf.mxu0
    %v815 = vadd.f32 0.0, %v814
    %v816 = vpop.f32.mrf.mxu0
    %v817 = vpop.f32.mrf.mxu0
    %v818 = vadd.f32 0.0, %v817
    %v819 = vpop.f32.mrf.mxu0
    %820 = vmatprep.mubr.bf16.mxu0 0
    %821 = vmatmul.mubr.bf16.gmra.mxu0 %v765
    %v822 = vpop.f32.mrf.mxu0
    %v823 = vadd.f32 0.0, %v822
    %v824 = vpop.f32.mrf.mxu0
    %v825 = vpop.f32.mrf.mxu0
    %v826 = vadd.f32 0.0, %v825
    %v827 = vpop.f32.mrf.mxu0
    %828 = vmatprep.mubr.bf16.mxu0 0
    %829 = vmatmul.mubr.bf16.gmra.mxu0 %v766
    %v830 = vpop.f32.mrf.mxu0
    %v831 = vadd.f32 0.0, %v830
    %v832 = vpop.f32.mrf.mxu0
    %v833 = vpop.f32.mrf.mxu0
    %v834 = vadd.f32 0.0, %v833
    %v835 = vpop.f32.mrf.mxu0
    %836 = vmatprep.mubr.bf16.mxu0 0
    %837 = vmatmul.mubr.bf16.gmra.mxu0 %v767
    %v838 = vpop.f32.mrf.mxu0
    %v839 = vadd.f32 0.0, %v838
    %v840 = vpop.f32.mrf.mxu0
    %v841 = vpop.f32.mrf.mxu0
    %v842 = vadd.f32 0.0, %v841
    %v843 = vpop.f32.mrf.mxu0
    %844 = vmatprep.mubr.bf16.mxu0 0
    %845 = vmatmul.mubr.bf16.gmra.mxu0 %v768
    %v846 = vpop.f32.mrf.mxu0
    %v847 = vadd.f32 0.0, %v846
    %v848 = vpop.f32.mrf.mxu0
    %v849 = vpop.f32.mrf.mxu0
    %v850 = vadd.f32 0.0, %v849
    %v851 = vpop.f32.mrf.mxu0
    %852 = vmatprep.mubr.bf16.mxu0 0
    %853 = vmatmul.mubr.bf16.gmra.mxu0 %v769
    %v854 = vpop.f32.mrf.mxu0
    %v855 = vadd.f32 0.0, %v854
    %v856 = vpop.f32.mrf.mxu0
    %v857 = vpop.f32.mrf.mxu0
    %v858 = vadd.f32 0.0, %v857
    %v859 = vpop.f32.mrf.mxu0
    %860 = vmatprep.mubr.bf16.mxu0 0
    %861 = vmatmul.mubr.bf16.gmra.mxu0 %v770
    %v862 = vpop.f32.mrf.mxu0
    %v863 = vadd.f32 0.0, %v862
    %v864 = vpop.f32.mrf.mxu0
    %v865 = vpop.f32.mrf.mxu0
    %v866 = vadd.f32 0.0, %v865
    %v867 = vpop.f32.mrf.mxu0
    %868 = vmatprep.mubr.bf16.mxu0 0
    %869 = vmatmul.mubr.bf16.gmra.mxu0 %v771
    %v870 = vpop.f32.mrf.mxu0
    %v871 = vadd.f32 0.0, %v870
    %v872 = vpop.f32.mrf.mxu0
    %v873 = vpop.f32.mrf.mxu0
    %v874 = vadd.f32 0.0, %v873
    %v875 = vpop.f32.mrf.mxu0
    %876 = vdwg.mxu0
    %877 = vmax.xlane.f32.xlu0 %v815
    %v878 = vpop.xlane.xlu0 %877
    %879 = vmax.xlane.f32.xlu0 %v818
    %v880 = vpop.xlane.xlu0 %879
    %881 = vmax.xlane.f32.xlu0 %v823
    %v882 = vpop.xlane.xlu0 %881
    %883 = vmax.xlane.f32.xlu0 %v826
    %v884 = vpop.xlane.xlu0 %883
    %885 = vmax.xlane.f32.xlu0 %v831
    %v886 = vpop.xlane.xlu0 %885
    %887 = vmax.xlane.f32.xlu0 %v834
    %v888 = vpop.xlane.xlu0 %887
    %889 = vmax.xlane.f32.xlu0 %v839
    %v890 = vpop.xlane.xlu0 %889
    %891 = vmax.xlane.f32.xlu0 %v842
    %v892 = vpop.xlane.xlu0 %891
    %893 = vmax.xlane.f32.xlu0 %v847
    %v894 = vpop.xlane.xlu0 %893
    %895 = vmax.xlane.f32.xlu0 %v850
    %v896 = vpop.xlane.xlu0 %895
    %897 = vmax.xlane.f32.xlu0 %v855
    %v898 = vpop.xlane.xlu0 %897
    %899 = vmax.xlane.f32.xlu0 %v858
    %v900 = vpop.xlane.xlu0 %899
    %901 = vmax.xlane.f32.xlu0 %v863
    %v902 = vpop.xlane.xlu0 %901
    %903 = vmax.xlane.f32.xlu0 %v866
    %v904 = vpop.xlane.xlu0 %903
    %905 = vmax.xlane.f32.xlu0 %v871
    %v906 = vpop.xlane.xlu0 %905
    %907 = vmax.xlane.f32.xlu0 %v874
    %v908 = vpop.xlane.xlu0 %907
    %v909 = vsub.f32 %v815, %v878
    %v910 = vsub.f32 %v818, %v880
    %v911 = vsub.f32 %v823, %v882
    %v912 = vsub.f32 %v826, %v884
    %v913 = vsub.f32 %v831, %v886
    %v914 = vsub.f32 %v834, %v888
    %v915 = vsub.f32 %v839, %v890
    %v916 = vsub.f32 %v842, %v892
    %v917 = vsub.f32 %v847, %v894
    %v918 = vsub.f32 %v850, %v896
    %v919 = vsub.f32 %v855, %v898
    %v920 = vsub.f32 %v858, %v900
    %v921 = vsub.f32 %v863, %v902
    %v922 = vsub.f32 %v866, %v904
    %v923 = vsub.f32 %v871, %v906
    %v924 = vsub.f32 %v874, %v908
    %v925 = vmul.f32 %v909, 1.442695
    %v926 = vpow.pop %v925
    %v927 = vmul.f32 %v910, 1.442695
    %v928 = vpow.pop %v927
    %v929 = vmul.f32 %v911, 1.442695
    %v930 = vpow.pop %v929
    %v931 = vmul.f32 %v912, 1.442695
    %v932 = vpow.pop %v931
    %v933 = vmul.f32 %v913, 1.442695
    %v934 = vpow.pop %v933
    %v935 = vmul.f32 %v914, 1.442695
    %v936 = vpow.pop %v935
    %v937 = vmul.f32 %v915, 1.442695
    %v938 = vpow.pop %v937
    %v939 = vmul.f32 %v916, 1.442695
    %v940 = vpow.pop %v939
    %v941 = vmul.f32 %v917, 1.442695
    %v942 = vpow.pop %v941
    %v943 = vmul.f32 %v918, 1.442695
    %v944 = vpow.pop %v943
    %v945 = vmul.f32 %v919, 1.442695
    %v946 = vpow.pop %v945
    %v947 = vmul.f32 %v920, 1.442695
    %v948 = vpow.pop %v947
    %v949 = vmul.f32 %v921, 1.442695
    %v950 = vpow.pop %v949
    %v951 = vmul.f32 %v922, 1.442695
    %v952 = vpow.pop %v951
    %v953 = vmul.f32 %v923, 1.442695
    %v954 = vpow.pop %v953
    %v955 = vmul.f32 %v924, 1.442695
    %v956 = vpow.pop %v955
    %957 = vadd.xlane.f32.xlu0 %v926
    %v958 = vpop.xlane.xlu0 %957
    %959 = vadd.xlane.f32.xlu0 %v928
    %v960 = vpop.xlane.xlu0 %959
    %961 = vadd.xlane.f32.xlu0 %v930
    %v962 = vpop.xlane.xlu0 %961
    %963 = vadd.xlane.f32.xlu0 %v932
    %v964 = vpop.xlane.xlu0 %963
    %965 = vadd.xlane.f32.xlu0 %v934
    %v966 = vpop.xlane.xlu0 %965
    %967 = vadd.xlane.f32.xlu0 %v936
    %v968 = vpop.xlane.xlu0 %967
    %969 = vadd.xlane.f32.xlu0 %v938
    %v970 = vpop.xlane.xlu0 %969
    %971 = vadd.xlane.f32.xlu0 %v940
    %v972 = vpop.xlane.xlu0 %971
    %973 = vadd.xlane.f32.xlu0 %v942
    %v974 = vpop.xlane.xlu0 %973
    %975 = vadd.xlane.f32.xlu0 %v944
    %v976 = vpop.xlane.xlu0 %975
    %977 = vadd.xlane.f32.xlu0 %v946
    %v978 = vpop.xlane.xlu0 %977
    %979 = vadd.xlane.f32.xlu0 %v948
    %v980 = vpop.xlane.xlu0 %979
    %981 = vadd.xlane.f32.xlu0 %v950
    %v982 = vpop.xlane.xlu0 %981
    %983 = vadd.xlane.f32.xlu0 %v952
    %v984 = vpop.xlane.xlu0 %983
    %985 = vadd.xlane.f32.xlu0 %v954
    %v986 = vpop.xlane.xlu0 %985
    %987 = vadd.xlane.f32.xlu0 %v956
    %v988 = vpop.xlane.xlu0 %987
    %v989 = vrcp.pop %v958
    %v990 = vrcp.pop %v960
    %v991 = vrcp.pop %v962
    %v992 = vrcp.pop %v964
    %v993 = vrcp.pop %v966
    %v994 = vrcp.pop %v968
    %v995 = vrcp.pop %v970
    %v996 = vrcp.pop %v972
    %v997 = vrcp.pop %v974
    %v998 = vrcp.pop %v976
    %v999 = vrcp.pop %v978
    %v1000 = vrcp.pop %v980
    %v1001 = vrcp.pop %v982
    %v1002 = vrcp.pop %v984
    %v1003 = vrcp.pop %v986
    %v1004 = vrcp.pop %v988
    %v1005 = vmul.f32 %v926, %v989
    %v1006 = vmul.f32 %v928, %v990
    %v1007 = vmul.f32 %v930, %v991
    %v1008 = vmul.f32 %v932, %v992
    %v1009 = vmul.f32 %v934, %v993
    %v1010 = vmul.f32 %v936, %v994
    %v1011 = vmul.f32 %v938, %v995
    %v1012 = vmul.f32 %v940, %v996
    %v1013 = vmul.f32 %v942, %v997
    %v1014 = vmul.f32 %v944, %v998
    %v1015 = vmul.f32 %v946, %v999
    %v1016 = vmul.f32 %v948, %v1000
    %v1017 = vmul.f32 %v950, %v1001
    %v1018 = vmul.f32 %v952, %v1002
    %v1019 = vmul.f32 %v954, %v1003
    %v1020 = vmul.f32 %v956, %v1004
    %v1021 = vpack.c.bf16 %v705, %v702
    %v1022 = vpack.c.bf16 %v713, %v710
    %v1023 = vpack.c.bf16 %v721, %v718
    %v1024 = vpack.c.bf16 %v729, %v726
    %v1025 = vpack.c.bf16 %v737, %v734
    %v1026 = vpack.c.bf16 %v745, %v742
    %v1027 = vpack.c.bf16 %v753, %v750
    %v1028 = vpack.c.bf16 %v761, %v758
    %v1029 = vpack.c.bf16 %v1006, %v1005
    %v1030 = vpack.c.bf16 %v1008, %v1007
    %v1031 = vpack.c.bf16 %v1010, %v1009
    %v1032 = vpack.c.bf16 %v1012, %v1011
    %v1033 = vpack.c.bf16 %v1014, %v1013
    %v1034 = vpack.c.bf16 %v1016, %v1015
    %v1035 = vpack.c.bf16 %v1018, %v1017
    %v1036 = vpack.c.bf16 %v1020, %v1019
    %1037 = vmatprep.subr.bf16.mxu0 0
    %1038 = vmatpush1.bf16.msra.mxu0 %v1036
    %1039 = vmatprep.subr.bf16.mxu0 0
    %1040 = vmatpush1.bf16.msra.mxu0 %v1035
    %1041 = vmatprep.subr.bf16.mxu0 0
    %1042 = vmatpush1.bf16.msra.mxu0 %v1034
    %1043 = vmatprep.subr.bf16.mxu0 0
    %1044 = vmatpush1.bf16.msra.mxu0 %v1033
    %1045 = vmatprep.subr.bf16.mxu0 0
    %1046 = vmatpush1.bf16.msra.mxu0 %v1032
    %1047 = vmatprep.subr.bf16.mxu0 0
    %1048 = vmatpush1.bf16.msra.mxu0 %v1031
    %1049 = vmatprep.subr.bf16.mxu0 0
    %1050 = vmatpush1.bf16.msra.mxu0 %v1030
    %1051 = vmatprep.subr.bf16.mxu0 0
    %1052 = vmatpush1.bf16.msra.mxu0 %v1029
    %1053 = vmatprep.subr.bf16.mxu0 0
    %1054 = vmatpush2.bf16.msra.mxu0 0
    %1055 = vmatprep.subr.bf16.mxu0 0
    %1056 = vmatpush2.bf16.msra.mxu0 0
    %1057 = vmatprep.subr.bf16.mxu0 0
    %1058 = vmatpush2.bf16.msra.mxu0 0
    %1059 = vmatprep.subr.bf16.mxu0 0
    %1060 = vmatpush2.bf16.msra.mxu0 0
    %1061 = vmatprep.subr.bf16.mxu0 0
    %1062 = vmatpush2.bf16.msra.mxu0 0
    %1063 = vmatprep.subr.bf16.mxu0 0
    %1064 = vmatpush2.bf16.msra.mxu0 0
    %1065 = vmatprep.subr.bf16.mxu0 0
    %1066 = vmatpush2.bf16.msra.mxu0 0
    %1067 = vmatprep.subr.bf16.mxu0 0
    %1068 = vmatpush2.bf16.msra.mxu0 0
    %1069 = vmatprep.mubr.bf16.mxu0 0
    %1070 = vmatmul.mubr.bf16.gmra.mxu0 %v1021
    %v1071 = vpop.f32.mrf.mxu0
    %v1072 = vadd.f32 0.0, %v1071
    %v1073 = vpop.f32.mrf.mxu0
    %v1074 = vpop.f32.mrf.mxu0
    %v1075 = vadd.f32 0.0, %v1074
    %v1076 = vpop.f32.mrf.mxu0
    %1077 = vmatprep.mubr.bf16.mxu0 0
    %1078 = vmatmul.mubr.bf16.gmra.mxu0 %v1022
    %v1079 = vpop.f32.mrf.mxu0
    %v1080 = vadd.f32 0.0, %v1079
    %v1081 = vpop.f32.mrf.mxu0
    %v1082 = vpop.f32.mrf.mxu0
    %v1083 = vadd.f32 0.0, %v1082
    %v1084 = vpop.f32.mrf.mxu0
    %1085 = vmatprep.mubr.bf16.mxu0 0
    %1086 = vmatmul.mubr.bf16.gmra.mxu0 %v1023
    %v1087 = vpop.f32.mrf.mxu0
    %v1088 = vadd.f32 0.0, %v1087
    %v1089 = vpop.f32.mrf.mxu0
    %v1090 = vpop.f32.mrf.mxu0
    %v1091 = vadd.f32 0.0, %v1090
    %v1092 = vpop.f32.mrf.mxu0
    %1093 = vmatprep.mubr.bf16.mxu0 0
    %1094 = vmatmul.mubr.bf16.gmra.mxu0 %v1024
    %v1095 = vpop.f32.mrf.mxu0
    %v1096 = vadd.f32 0.0, %v1095
    %v1097 = vpop.f32.mrf.mxu0
    %v1098 = vpop.f32.mrf.mxu0
    %v1099 = vadd.f32 0.0, %v1098
    %v1100 = vpop.f32.mrf.mxu0
    %1101 = vmatprep.mubr.bf16.mxu0 0
    %1102 = vmatmul.mubr.bf16.gmra.mxu0 %v1025
    %v1103 = vpop.f32.mrf.mxu0
    %v1104 = vadd.f32 0.0, %v1103
    %v1105 = vpop.f32.mrf.mxu0
    %v1106 = vpop.f32.mrf.mxu0
    %v1107 = vadd.f32 0.0, %v1106
    %v1108 = vpop.f32.mrf.mxu0
    %1109 = vmatprep.mubr.bf16.mxu0 0
    %1110 = vmatmul.mubr.bf16.gmra.mxu0 %v1026
    %v1111 = vpop.f32.mrf.mxu0
    %v1112 = vadd.f32 0.0, %v1111
    %v1113 = vpop.f32.mrf.mxu0
    %v1114 = vpop.f32.mrf.mxu0
    %v1115 = vadd.f32 0.0, %v1114
    %v1116 = vpop.f32.mrf.mxu0
    %1117 = vmatprep.mubr.bf16.mxu0 0
    %1118 = vmatmul.mubr.bf16.gmra.mxu0 %v1027
    %v1119 = vpop.f32.mrf.mxu0
    %v1120 = vadd.f32 0.0, %v1119
    %v1121 = vpop.f32.mrf.mxu0
    %v1122 = vpop.f32.mrf.mxu0
    %v1123 = vadd.f32 0.0, %v1122
    %v1124 = vpop.f32.mrf.mxu0
    %1125 = vmatprep.mubr.bf16.mxu0 0
    %1126 = vmatmul.mubr.bf16.gmra.mxu0 %v1028
    %v1127 = vpop.f32.mrf.mxu0
    %v1128 = vadd.f32 0.0, %v1127
    %v1129 = vpop.f32.mrf.mxu0
    %v1130 = vpop.f32.mrf.mxu0
    %v1131 = vadd.f32 0.0, %v1130
    %v1132 = vpop.f32.mrf.mxu0
    %1133 = vdwg.mxu0
    %v1134 = vstv %s130
    %v1135 = vmul.f32 %v1134, %v1072
    %v1136 = vmul.f32 %v1134, %v1075
    %v1137 = vmul.f32 %v1134, %v1080
    %v1138 = vmul.f32 %v1134, %v1083
    %v1139 = vmul.f32 %v1134, %v1088
    %v1140 = vmul.f32 %v1134, %v1091
    %v1141 = vmul.f32 %v1134, %v1096
    %v1142 = vmul.f32 %v1134, %v1099
    %v1143 = vmul.f32 %v1134, %v1104
    %v1144 = vmul.f32 %v1134, %v1107
    %v1145 = vmul.f32 %v1134, %v1112
    %v1146 = vmul.f32 %v1134, %v1115
    %v1147 = vmul.f32 %v1134, %v1120
    %v1148 = vmul.f32 %v1134, %v1123
    %v1149 = vmul.f32 %v1134, %v1128
    %v1150 = vmul.f32 %v1134, %v1131
    %v1151 = vadd.f32 %v1135, %v131
    %v1152 = vadd.f32 %v1136, %v132
    %v1153 = vadd.f32 %v1137, %v133
    %v1154 = vadd.f32 %v1138, %v134
    %v1155 = vadd.f32 %v1139, %v135
    %v1156 = vadd.f32 %v1140, %v136
    %v1157 = vadd.f32 %v1141, %v137
    %v1158 = vadd.f32 %v1142, %v138
    %v1159 = vadd.f32 %v1143, %v139
    %v1160 = vadd.f32 %v1144, %v140
    %v1161 = vadd.f32 %v1145, %v141
    %v1162 = vadd.f32 %v1146, %v142
    %v1163 = vadd.f32 %v1147, %v143
    %v1164 = vadd.f32 %v1148, %v144
    %v1165 = vadd.f32 %v1149, %v145
    %v1166 = vadd.f32 %v1150, %v146
    %1167 = vst [vmem:[#allocation6] sm:$0xff] %v1151
    %1168 = vst [vmem:[#allocation6 + $0x8] sm:$0xff] %v1152
    %1169 = vst [vmem:[#allocation6 + $0x10] sm:$0xff] %v1153
    %1170 = vst [vmem:[#allocation6 + $0x18] sm:$0xff] %v1154
    %1171 = vst [vmem:[#allocation6 + $0x20] sm:$0xff] %v1155
    %1172 = vst [vmem:[#allocation6 + $0x28] sm:$0xff] %v1156
    %1173 = vst [vmem:[#allocation6 + $0x30] sm:$0xff] %v1157
    %1174 = vst [vmem:[#allocation6 + $0x38] sm:$0xff] %v1158
    %1175 = vst [vmem:[#allocation6 + $0x40] sm:$0xff] %v1159
    %1176 = vst [vmem:[#allocation6 + $0x48] sm:$0xff] %v1160
    %1177 = vst [vmem:[#allocation6 + $0x50] sm:$0xff] %v1161
    %1178 = vst [vmem:[#allocation6 + $0x58] sm:$0xff] %v1162
    %1179 = vst [vmem:[#allocation6 + $0x60] sm:$0xff] %v1163
    %1180 = vst [vmem:[#allocation6 + $0x68] sm:$0xff] %v1164
    %1181 = vst [vmem:[#allocation6 + $0x70] sm:$0xff] %v1165
    %1182 = vst [vmem:[#allocation6 + $0x78] sm:$0xff] %v1166
    %s1183 = scalar_lea.vmem %s0, 128
    %v1184 = vld [vmem:[%s1183] sm:$0xff]
    %v1185 = vld [vmem:[%s1183 + $0x8] sm:$0xff]
    %v1186 = vld [vmem:[%s1183 + $0x10] sm:$0xff]
    %v1187 = vld [vmem:[%s1183 + $0x18] sm:$0xff]
    %v1188 = vld [vmem:[%s1183 + $0x20] sm:$0xff]
    %v1189 = vld [vmem:[%s1183 + $0x28] sm:$0xff]
    %v1190 = vld [vmem:[%s1183 + $0x30] sm:$0xff]
    %v1191 = vld [vmem:[%s1183 + $0x38] sm:$0xff]
    %v1192 = vld [vmem:[%s1183 + $0x40] sm:$0xff]
    %v1193 = vld [vmem:[%s1183 + $0x48] sm:$0xff]
    %v1194 = vld [vmem:[%s1183 + $0x50] sm:$0xff]
    %v1195 = vld [vmem:[%s1183 + $0x58] sm:$0xff]
    %v1196 = vld [vmem:[%s1183 + $0x60] sm:$0xff]
    %v1197 = vld [vmem:[%s1183 + $0x68] sm:$0xff]
    %v1198 = vld [vmem:[%s1183 + $0x70] sm:$0xff]
    %v1199 = vld [vmem:[%s1183 + $0x78] sm:$0xff]
    %v1200 = vpack.c.bf16 %v1185, %v1184
    %v1201 = vpack.c.bf16 %v1187, %v1186
    %v1202 = vpack.c.bf16 %v1189, %v1188
    %v1203 = vpack.c.bf16 %v1191, %v1190
    %v1204 = vpack.c.bf16 %v1193, %v1192
    %v1205 = vpack.c.bf16 %v1195, %v1194
    %v1206 = vpack.c.bf16 %v1197, %v1196
    %v1207 = vpack.c.bf16 %v1199, %v1198
    %1208 = vmatprep.subr.bf16.mxu0 0
    %1209 = vmatpush1.bf16.msra.mxu0 %v1207
    %1210 = vmatprep.subr.bf16.mxu0 0
    %1211 = vmatpush1.bf16.msra.mxu0 %v1206
    %1212 = vmatprep.subr.bf16.mxu0 0
    %1213 = vmatpush1.bf16.msra.mxu0 %v1205
    %1214 = vmatprep.subr.bf16.mxu0 0
    %1215 = vmatpush1.bf16.msra.mxu0 %v1204
    %1216 = vmatprep.subr.bf16.mxu0 0
    %1217 = vmatpush1.bf16.msra.mxu0 %v1203
    %1218 = vmatprep.subr.bf16.mxu0 0
    %1219 = vmatpush1.bf16.msra.mxu0 %v1202
    %1220 = vmatprep.subr.bf16.mxu0 0
    %1221 = vmatpush1.bf16.msra.mxu0 %v1201
    %1222 = vmatprep.subr.bf16.mxu0 0
    %1223 = vmatpush1.bf16.msra.mxu0 %v1200
    %1224 = vmatprep.subr.bf16.mxu0 0
    %1225 = vmatpush2.bf16.msra.mxu0 0
    %1226 = vmatprep.subr.bf16.mxu0 0
    %1227 = vmatpush2.bf16.msra.mxu0 0
    %1228 = vmatprep.subr.bf16.mxu0 0
    %1229 = vmatpush2.bf16.msra.mxu0 0
    %1230 = vmatprep.subr.bf16.mxu0 0
    %1231 = vmatpush2.bf16.msra.mxu0 0
    %1232 = vmatprep.subr.bf16.mxu0 0
    %1233 = vmatpush2.bf16.msra.mxu0 0
    %1234 = vmatprep.subr.bf16.mxu0 0
    %1235 = vmatpush2.bf16.msra.mxu0 0
    %1236 = vmatprep.subr.bf16.mxu0 0
    %1237 = vmatpush2.bf16.msra.mxu0 0
    %1238 = vmatprep.subr.bf16.mxu0 0
    %1239 = vmatpush2.bf16.msra.mxu0 0
    %1240 = vmatprep.mubr.bf16.mxu0 0
    %1241 = vmatmul.mubr.bf16.gmra.mxu0 %v491
    %v1242 = vpop.f32.mrf.mxu0
    %v1243 = vadd.f32 %v158, %v1242
    %v1244 = vpop.f32.mrf.mxu0
    %v1245 = vpop.f32.mrf.mxu0
    %v1246 = vadd.f32 %v163, %v1245
    %v1247 = vpop.f32.mrf.mxu0
    %1248 = vmatprep.mubr.bf16.mxu0 0
    %1249 = vmatmul.mubr.bf16.gmra.mxu0 %v492
    %v1250 = vpop.f32.mrf.mxu0
    %v1251 = vadd.f32 %v168, %v1250
    %v1252 = vpop.f32.mrf.mxu0
    %v1253 = vpop.f32.mrf.mxu0
    %v1254 = vadd.f32 %v173, %v1253
    %v1255 = vpop.f32.mrf.mxu0
    %1256 = vmatprep.mubr.bf16.mxu0 0
    %1257 = vmatmul.mubr.bf16.gmra.mxu0 %v493
    %v1258 = vpop.f32.mrf.mxu0
    %v1259 = vadd.f32 %v178, %v1258
    %v1260 = vpop.f32.mrf.mxu0
    %v1261 = vpop.f32.mrf.mxu0
    %v1262 = vadd.f32 %v183, %v1261
    %v1263 = vpop.f32.mrf.mxu0
    %1264 = vmatprep.mubr.bf16.mxu0 0
    %1265 = vmatmul.mubr.bf16.gmra.mxu0 %v494
    %v1266 = vpop.f32.mrf.mxu0
    %v1267 = vadd.f32 %v188, %v1266
    %v1268 = vpop.f32.mrf.mxu0
    %v1269 = vpop.f32.mrf.mxu0
    %v1270 = vadd.f32 %v193, %v1269
    %v1271 = vpop.f32.mrf.mxu0
    %1272 = vmatprep.mubr.bf16.mxu0 0
    %1273 = vmatmul.mubr.bf16.gmra.mxu0 %v495
    %v1274 = vpop.f32.mrf.mxu0
    %v1275 = vadd.f32 %v198, %v1274
    %v1276 = vpop.f32.mrf.mxu0
    %v1277 = vpop.f32.mrf.mxu0
    %v1278 = vadd.f32 %v203, %v1277
    %v1279 = vpop.f32.mrf.mxu0
    %1280 = vmatprep.mubr.bf16.mxu0 0
    %1281 = vmatmul.mubr.bf16.gmra.mxu0 %v496
    %v1282 = vpop.f32.mrf.mxu0
    %v1283 = vadd.f32 %v208, %v1282
    %v1284 = vpop.f32.mrf.mxu0
    %v1285 = vpop.f32.mrf.mxu0
    %v1286 = vadd.f32 %v213, %v1285
    %v1287 = vpop.f32.mrf.mxu0
    %1288 = vmatprep.mubr.bf16.mxu0 0
    %1289 = vmatmul.mubr.bf16.gmra.mxu0 %v497
    %v1290 = vpop.f32.mrf.mxu0
    %v1291 = vadd.f32 %v218, %v1290
    %v1292 = vpop.f32.mrf.mxu0
    %v1293 = vpop.f32.mrf.mxu0
    %v1294 = vadd.f32 %v223, %v1293
    %v1295 = vpop.f32.mrf.mxu0
    %1296 = vmatprep.mubr.bf16.mxu0 0
    %1297 = vmatmul.mubr.bf16.gmra.mxu0 %v498
    %v1298 = vpop.f32.mrf.mxu0
    %v1299 = vadd.f32 %v228, %v1298
    %v1300 = vpop.f32.mrf.mxu0
    %v1301 = vpop.f32.mrf.mxu0
    %v1302 = vadd.f32 %v233, %v1301
    %v1303 = vpop.f32.mrf.mxu0
    %1304 = vmatprep.mubr.bf16.mxu0 0
    %1305 = vmatmul.mubr.bf16.gmra.mxu0 %v499
    %v1306 = vpop.f32.mrf.mxu0
    %v1307 = vadd.f32 %v238, %v1306
    %v1308 = vpop.f32.mrf.mxu0
    %v1309 = vpop.f32.mrf.mxu0
    %v1310 = vadd.f32 %v243, %v1309
    %v1311 = vpop.f32.mrf.mxu0
    %1312 = vmatprep.mubr.bf16.mxu0 0
    %1313 = vmatmul.mubr.bf16.gmra.mxu0 %v500
    %v1314 = vpop.f32.mrf.mxu0
    %v1315 = vadd.f32 %v248, %v1314
    %v1316 = vpop.f32.mrf.mxu0
    %v1317 = vpop.f32.mrf.mxu0
    %v1318 = vadd.f32 %v253, %v1317
    %v1319 = vpop.f32.mrf.mxu0
    %1320 = vmatprep.mubr.bf16.mxu0 0
    %1321 = vmatmul.mubr.bf16.gmra.mxu0 %v501
    %v1322 = vpop.f32.mrf.mxu0
    %v1323 = vadd.f32 %v258, %v1322
    %v1324 = vpop.f32.mrf.mxu0
    %v1325 = vpop.f32.mrf.mxu0
    %v1326 = vadd.f32 %v263, %v1325
    %v1327 = vpop.f32.mrf.mxu0
    %1328 = vmatprep.mubr.bf16.mxu0 0
    %1329 = vmatmul.mubr.bf16.gmra.mxu0 %v502
    %v1330 = vpop.f32.mrf.mxu0
    %v1331 = vadd.f32 %v268, %v1330
    %v1332 = vpop.f32.mrf.mxu0
    %v1333 = vpop.f32.mrf.mxu0
    %v1334 = vadd.f32 %v273, %v1333
    %v1335 = vpop.f32.mrf.mxu0
    %1336 = vmatprep.mubr.bf16.mxu0 0
    %1337 = vmatmul.mubr.bf16.gmra.mxu0 %v503
    %v1338 = vpop.f32.mrf.mxu0
    %v1339 = vadd.f32 %v278, %v1338
    %v1340 = vpop.f32.mrf.mxu0
    %v1341 = vpop.f32.mrf.mxu0
    %v1342 = vadd.f32 %v283, %v1341
    %v1343 = vpop.f32.mrf.mxu0
    %1344 = vmatprep.mubr.bf16.mxu0 0
    %1345 = vmatmul.mubr.bf16.gmra.mxu0 %v504
    %v1346 = vpop.f32.mrf.mxu0
    %v1347 = vadd.f32 %v288, %v1346
    %v1348 = vpop.f32.mrf.mxu0
    %v1349 = vpop.f32.mrf.mxu0
    %v1350 = vadd.f32 %v293, %v1349
    %v1351 = vpop.f32.mrf.mxu0
    %1352 = vmatprep.mubr.bf16.mxu0 0
    %1353 = vmatmul.mubr.bf16.gmra.mxu0 %v505
    %v1354 = vpop.f32.mrf.mxu0
    %v1355 = vadd.f32 %v298, %v1354
    %v1356 = vpop.f32.mrf.mxu0
    %v1357 = vpop.f32.mrf.mxu0
    %v1358 = vadd.f32 %v303, %v1357
    %v1359 = vpop.f32.mrf.mxu0
    %1360 = vmatprep.mubr.bf16.mxu0 0
    %1361 = vmatmul.mubr.bf16.gmra.mxu0 %v506
    %v1362 = vpop.f32.mrf.mxu0
    %v1363 = vadd.f32 %v308, %v1362
    %v1364 = vpop.f32.mrf.mxu0
    %v1365 = vpop.f32.mrf.mxu0
    %v1366 = vadd.f32 %v313, %v1365
    %v1367 = vpop.f32.mrf.mxu0
    %1368 = vmatprep.mubr.bf16.mxu0 0
    %1369 = vmatmul.mubr.bf16.gmra.mxu0 %v507
    %v1370 = vpop.f32.mrf.mxu0
    %v1371 = vadd.f32 %v318, %v1370
    %v1372 = vpop.f32.mrf.mxu0
    %v1373 = vpop.f32.mrf.mxu0
    %v1374 = vadd.f32 %v323, %v1373
    %v1375 = vpop.f32.mrf.mxu0
    %1376 = vmatprep.mubr.bf16.mxu0 0
    %1377 = vmatmul.mubr.bf16.gmra.mxu0 %v508
    %v1378 = vpop.f32.mrf.mxu0
    %v1379 = vadd.f32 %v328, %v1378
    %v1380 = vpop.f32.mrf.mxu0
    %v1381 = vpop.f32.mrf.mxu0
    %v1382 = vadd.f32 %v333, %v1381
    %v1383 = vpop.f32.mrf.mxu0
    %1384 = vmatprep.mubr.bf16.mxu0 0
    %1385 = vmatmul.mubr.bf16.gmra.mxu0 %v509
    %v1386 = vpop.f32.mrf.mxu0
    %v1387 = vadd.f32 %v338, %v1386
    %v1388 = vpop.f32.mrf.mxu0
    %v1389 = vpop.f32.mrf.mxu0
    %v1390 = vadd.f32 %v343, %v1389
    %v1391 = vpop.f32.mrf.mxu0
    %1392 = vmatprep.mubr.bf16.mxu0 0
    %1393 = vmatmul.mubr.bf16.gmra.mxu0 %v510
    %v1394 = vpop.f32.mrf.mxu0
    %v1395 = vadd.f32 %v348, %v1394
    %v1396 = vpop.f32.mrf.mxu0
    %v1397 = vpop.f32.mrf.mxu0
    %v1398 = vadd.f32 %v353, %v1397
    %v1399 = vpop.f32.mrf.mxu0
    %1400 = vmatprep.mubr.bf16.mxu0 0
    %1401 = vmatmul.mubr.bf16.gmra.mxu0 %v511
    %v1402 = vpop.f32.mrf.mxu0
    %v1403 = vadd.f32 %v358, %v1402
    %v1404 = vpop.f32.mrf.mxu0
    %v1405 = vpop.f32.mrf.mxu0
    %v1406 = vadd.f32 %v363, %v1405
    %v1407 = vpop.f32.mrf.mxu0
    %1408 = vmatprep.mubr.bf16.mxu0 0
    %1409 = vmatmul.mubr.bf16.gmra.mxu0 %v512
    %v1410 = vpop.f32.mrf.mxu0
    %v1411 = vadd.f32 %v368, %v1410
    %v1412 = vpop.f32.mrf.mxu0
    %v1413 = vpop.f32.mrf.mxu0
    %v1414 = vadd.f32 %v373, %v1413
    %v1415 = vpop.f32.mrf.mxu0
    %1416 = vmatprep.mubr.bf16.mxu0 0
    %1417 = vmatmul.mubr.bf16.gmra.mxu0 %v513
    %v1418 = vpop.f32.mrf.mxu0
    %v1419 = vadd.f32 %v378, %v1418
    %v1420 = vpop.f32.mrf.mxu0
    %v1421 = vpop.f32.mrf.mxu0
    %v1422 = vadd.f32 %v383, %v1421
    %v1423 = vpop.f32.mrf.mxu0
    %1424 = vmatprep.mubr.bf16.mxu0 0
    %1425 = vmatmul.mubr.bf16.gmra.mxu0 %v514
    %v1426 = vpop.f32.mrf.mxu0
    %v1427 = vadd.f32 %v388, %v1426
    %v1428 = vpop.f32.mrf.mxu0
    %v1429 = vpop.f32.mrf.mxu0
    %v1430 = vadd.f32 %v393, %v1429
    %v1431 = vpop.f32.mrf.mxu0
    %1432 = vdwg.mxu0
    %v1433 = vpack.c.bf16 %v1246, %v1243
    %v1434 = vpack.c.bf16 %v1254, %v1251
    %v1435 = vpack.c.bf16 %v1262, %v1259
    %v1436 = vpack.c.bf16 %v1270, %v1267
    %v1437 = vpack.c.bf16 %v1278, %v1275
    %v1438 = vpack.c.bf16 %v1286, %v1283
    %v1439 = vpack.c.bf16 %v1294, %v1291
    %v1440 = vpack.c.bf16 %v1302, %v1299
    %v1441 = vpack.c.bf16 %v1310, %v1307
    %v1442 = vpack.c.bf16 %v1318, %v1315
    %v1443 = vpack.c.bf16 %v1326, %v1323
    %v1444 = vpack.c.bf16 %v1334, %v1331
    %v1445 = vpack.c.bf16 %v1342, %v1339
    %v1446 = vpack.c.bf16 %v1350, %v1347
    %v1447 = vpack.c.bf16 %v1358, %v1355
    %v1448 = vpack.c.bf16 %v1366, %v1363
    %1449 = vmatprep.subr.bf16.mxu0 0
    %1450 = vmatpush1.bf16.xpose.msra.mxu0 %v1448
    %1451 = vmatprep.subr.bf16.mxu0 0
    %1452 = vmatpush1.bf16.xpose.msra.mxu0 %v1447
    %1453 = vmatprep.subr.bf16.mxu0 0
    %1454 = vmatpush1.bf16.xpose.msra.mxu0 %v1446
    %1455 = vmatprep.subr.bf16.mxu0 0
    %1456 = vmatpush1.bf16.xpose.msra.mxu0 %v1445
    %1457 = vmatprep.subr.bf16.mxu0 0
    %1458 = vmatpush1.bf16.xpose.msra.mxu0 %v1444
    %1459 = vmatprep.subr.bf16.mxu0 0
    %1460 = vmatpush1.bf16.xpose.msra.mxu0 %v1443
    %1461 = vmatprep.subr.bf16.mxu0 0
    %1462 = vmatpush1.bf16.xpose.msra.mxu0 %v1442
    %1463 = vmatprep.subr.bf16.mxu0 0
    %1464 = vmatpush1.bf16.xpose.msra.mxu0 %v1441
    %1465 = vmatprep.subr.bf16.mxu0 0
    %1466 = vmatpush2.bf16.xpose.msra.mxu0 0
    %1467 = vmatprep.subr.bf16.mxu0 0
    %1468 = vmatpush2.bf16.xpose.msra.mxu0 0
    %1469 = vmatprep.subr.bf16.mxu0 0
    %1470 = vmatpush2.bf16.xpose.msra.mxu0 0
    %1471 = vmatprep.subr.bf16.mxu0 0
    %1472 = vmatpush2.bf16.xpose.msra.mxu0 0
    %1473 = vmatprep.subr.bf16.mxu0 0
    %1474 = vmatpush2.bf16.xpose.msra.mxu0 0
    %1475 = vmatprep.subr.bf16.mxu0 0
    %1476 = vmatpush2.bf16.xpose.msra.mxu0 0
    %1477 = vmatprep.subr.bf16.mxu0 0
    %1478 = vmatpush2.bf16.xpose.msra.mxu0 0
    %1479 = vmatprep.subr.bf16.mxu0 0
    %1480 = vmatpush2.bf16.xpose.msra.mxu0 0
    %1481 = vmatprep.mubr.bf16.mxu0 0
    %1482 = vmatmul.mubr.bf16.gmra.mxu0 %v1433
    %v1483 = vpop.f32.mrf.mxu0
    %v1484 = vadd.f32 0.0, %v1483
    %v1485 = vpop.f32.mrf.mxu0
    %v1486 = vpop.f32.mrf.mxu0
    %v1487 = vadd.f32 0.0, %v1486
    %v1488 = vpop.f32.mrf.mxu0
    %1489 = vmatprep.mubr.bf16.mxu0 0
    %1490 = vmatmul.mubr.bf16.gmra.mxu0 %v1434
    %v1491 = vpop.f32.mrf.mxu0
    %v1492 = vadd.f32 0.0, %v1491
    %v1493 = vpop.f32.mrf.mxu0
    %v1494 = vpop.f32.mrf.mxu0
    %v1495 = vadd.f32 0.0, %v1494
    %v1496 = vpop.f32.mrf.mxu0
    %1497 = vmatprep.mubr.bf16.mxu0 0
    %1498 = vmatmul.mubr.bf16.gmra.mxu0 %v1435
    %v1499 = vpop.f32.mrf.mxu0
    %v1500 = vadd.f32 0.0, %v1499
    %v1501 = vpop.f32.mrf.mxu0
    %v1502 = vpop.f32.mrf.mxu0
    %v1503 = vadd.f32 0.0, %v1502
    %v1504 = vpop.f32.mrf.mxu0
    %1505 = vmatprep.mubr.bf16.mxu0 0
    %1506 = vmatmul.mubr.bf16.gmra.mxu0 %v1436
    %v1507 = vpop.f32.mrf.mxu0
    %v1508 = vadd.f32 0.0, %v1507
    %v1509 = vpop.f32.mrf.mxu0
    %v1510 = vpop.f32.mrf.mxu0
    %v1511 = vadd.f32 0.0, %v1510
    %v1512 = vpop.f32.mrf.mxu0
    %1513 = vmatprep.mubr.bf16.mxu0 0
    %1514 = vmatmul.mubr.bf16.gmra.mxu0 %v1437
    %v1515 = vpop.f32.mrf.mxu0
    %v1516 = vadd.f32 0.0, %v1515
    %v1517 = vpop.f32.mrf.mxu0
    %v1518 = vpop.f32.mrf.mxu0
    %v1519 = vadd.f32 0.0, %v1518
    %v1520 = vpop.f32.mrf.mxu0
    %1521 = vmatprep.mubr.bf16.mxu0 0
    %1522 = vmatmul.mubr.bf16.gmra.mxu0 %v1438
    %v1523 = vpop.f32.mrf.mxu0
    %v1524 = vadd.f32 0.0, %v1523
    %v1525 = vpop.f32.mrf.mxu0
    %v1526 = vpop.f32.mrf.mxu0
    %v1527 = vadd.f32 0.0, %v1526
    %v1528 = vpop.f32.mrf.mxu0
    %1529 = vmatprep.mubr.bf16.mxu0 0
    %1530 = vmatmul.mubr.bf16.gmra.mxu0 %v1439
    %v1531 = vpop.f32.mrf.mxu0
    %v1532 = vadd.f32 0.0, %v1531
    %v1533 = vpop.f32.mrf.mxu0
    %v1534 = vpop.f32.mrf.mxu0
    %v1535 = vadd.f32 0.0, %v1534
    %v1536 = vpop.f32.mrf.mxu0
    %1537 = vmatprep.mubr.bf16.mxu0 0
    %1538 = vmatmul.mubr.bf16.gmra.mxu0 %v1440
    %v1539 = vpop.f32.mrf.mxu0
    %v1540 = vadd.f32 0.0, %v1539
    %v1541 = vpop.f32.mrf.mxu0
    %v1542 = vpop.f32.mrf.mxu0
    %v1543 = vadd.f32 0.0, %v1542
    %v1544 = vpop.f32.mrf.mxu0
    %1545 = vdwg.mxu0
    %1546 = vmax.xlane.f32.xlu0 %v1484
    %v1547 = vpop.xlane.xlu0 %1546
    %1548 = vmax.xlane.f32.xlu0 %v1487
    %v1549 = vpop.xlane.xlu0 %1548
    %1550 = vmax.xlane.f32.xlu0 %v1492
    %v1551 = vpop.xlane.xlu0 %1550
    %1552 = vmax.xlane.f32.xlu0 %v1495
    %v1553 = vpop.xlane.xlu0 %1552
    %1554 = vmax.xlane.f32.xlu0 %v1500
    %v1555 = vpop.xlane.xlu0 %1554
    %1556 = vmax.xlane.f32.xlu0 %v1503
    %v1557 = vpop.xlane.xlu0 %1556
    %1558 = vmax.xlane.f32.xlu0 %v1508
    %v1559 = vpop.xlane.xlu0 %1558
    %1560 = vmax.xlane.f32.xlu0 %v1511
    %v1561 = vpop.xlane.xlu0 %1560
    %1562 = vmax.xlane.f32.xlu0 %v1516
    %v1563 = vpop.xlane.xlu0 %1562
    %1564 = vmax.xlane.f32.xlu0 %v1519
    %v1565 = vpop.xlane.xlu0 %1564
    %1566 = vmax.xlane.f32.xlu0 %v1524
    %v1567 = vpop.xlane.xlu0 %1566
    %1568 = vmax.xlane.f32.xlu0 %v1527
    %v1569 = vpop.xlane.xlu0 %1568
    %1570 = vmax.xlane.f32.xlu0 %v1532
    %v1571 = vpop.xlane.xlu0 %1570
    %1572 = vmax.xlane.f32.xlu0 %v1535
    %v1573 = vpop.xlane.xlu0 %1572
    %1574 = vmax.xlane.f32.xlu0 %v1540
    %v1575 = vpop.xlane.xlu0 %1574
    %1576 = vmax.xlane.f32.xlu0 %v1543
    %v1577 = vpop.xlane.xlu0 %1576
    %v1578 = vsub.f32 %v1484, %v1547
    %v1579 = vsub.f32 %v1487, %v1549
    %v1580 = vsub.f32 %v1492, %v1551
    %v1581 = vsub.f32 %v1495, %v1553
    %v1582 = vsub.f32 %v1500, %v1555
    %v1583 = vsub.f32 %v1503, %v1557
    %v1584 = vsub.f32 %v1508, %v1559
    %v1585 = vsub.f32 %v1511, %v1561
    %v1586 = vsub.f32 %v1516, %v1563
    %v1587 = vsub.f32 %v1519, %v1565
    %v1588 = vsub.f32 %v1524, %v1567
    %v1589 = vsub.f32 %v1527, %v1569
    %v1590 = vsub.f32 %v1532, %v1571
    %v1591 = vsub.f32 %v1535, %v1573
    %v1592 = vsub.f32 %v1540, %v1575
    %v1593 = vsub.f32 %v1543, %v1577
    %v1594 = vmul.f32 %v1578, 1.442695
    %v1595 = vpow.pop %v1594
    %v1596 = vmul.f32 %v1579, 1.442695
    %v1597 = vpow.pop %v1596
    %v1598 = vmul.f32 %v1580, 1.442695
    %v1599 = vpow.pop %v1598
    %v1600 = vmul.f32 %v1581, 1.442695
    %v1601 = vpow.pop %v1600
    %v1602 = vmul.f32 %v1582, 1.442695
    %v1603 = vpow.pop %v1602
    %v1604 = vmul.f32 %v1583, 1.442695
    %v1605 = vpow.pop %v1604
    %v1606 = vmul.f32 %v1584, 1.442695
    %v1607 = vpow.pop %v1606
    %v1608 = vmul.f32 %v1585, 1.442695
    %v1609 = vpow.pop %v1608
    %v1610 = vmul.f32 %v1586, 1.442695
    %v1611 = vpow.pop %v1610
    %v1612 = vmul.f32 %v1587, 1.442695
    %v1613 = vpow.pop %v1612
    %v1614 = vmul.f32 %v1588, 1.442695
    %v1615 = vpow.pop %v1614
    %v1616 = vmul.f32 %v1589, 1.442695
    %v1617 = vpow.pop %v1616
    %v1618 = vmul.f32 %v1590, 1.442695
    %v1619 = vpow.pop %v1618
    %v1620 = vmul.f32 %v1591, 1.442695
    %v1621 = vpow.pop %v1620
    %v1622 = vmul.f32 %v1592, 1.442695
    %v1623 = vpow.pop %v1622
    %v1624 = vmul.f32 %v1593, 1.442695
    %v1625 = vpow.pop %v1624
    %1626 = vadd.xlane.f32.xlu0 %v1595
    %v1627 = vpop.xlane.xlu0 %1626
    %1628 = vadd.xlane.f32.xlu0 %v1597
    %v1629 = vpop.xlane.xlu0 %1628
    %1630 = vadd.xlane.f32.xlu0 %v1599
    %v1631 = vpop.xlane.xlu0 %1630
    %1632 = vadd.xlane.f32.xlu0 %v1601
    %v1633 = vpop.xlane.xlu0 %1632
    %1634 = vadd.xlane.f32.xlu0 %v1603
    %v1635 = vpop.xlane.xlu0 %1634
    %1636 = vadd.xlane.f32.xlu0 %v1605
    %v1637 = vpop.xlane.xlu0 %1636
    %1638 = vadd.xlane.f32.xlu0 %v1607
    %v1639 = vpop.xlane.xlu0 %1638
    %1640 = vadd.xlane.f32.xlu0 %v1609
    %v1641 = vpop.xlane.xlu0 %1640
    %1642 = vadd.xlane.f32.xlu0 %v1611
    %v1643 = vpop.xlane.xlu0 %1642
    %1644 = vadd.xlane.f32.xlu0 %v1613
    %v1645 = vpop.xlane.xlu0 %1644
    %1646 = vadd.xlane.f32.xlu0 %v1615
    %v1647 = vpop.xlane.xlu0 %1646
    %1648 = vadd.xlane.f32.xlu0 %v1617
    %v1649 = vpop.xlane.xlu0 %1648
    %1650 = vadd.xlane.f32.xlu0 %v1619
    %v1651 = vpop.xlane.xlu0 %1650
    %1652 = vadd.xlane.f32.xlu0 %v1621
    %v1653 = vpop.xlane.xlu0 %1652
    %1654 = vadd.xlane.f32.xlu0 %v1623
    %v1655 = vpop.xlane.xlu0 %1654
    %1656 = vadd.xlane.f32.xlu0 %v1625
    %v1657 = vpop.xlane.xlu0 %1656
    %v1658 = vrcp.pop %v1627
    %v1659 = vrcp.pop %v1629
    %v1660 = vrcp.pop %v1631
    %v1661 = vrcp.pop %v1633
    %v1662 = vrcp.pop %v1635
    %v1663 = vrcp.pop %v1637
    %v1664 = vrcp.pop %v1639
    %v1665 = vrcp.pop %v1641
    %v1666 = vrcp.pop %v1643
    %v1667 = vrcp.pop %v1645
    %v1668 = vrcp.pop %v1647
    %v1669 = vrcp.pop %v1649
    %v1670 = vrcp.pop %v1651
    %v1671 = vrcp.pop %v1653
    %v1672 = vrcp.pop %v1655
    %v1673 = vrcp.pop %v1657
    %v1674 = vmul.f32 %v1595, %v1658
    %v1675 = vmul.f32 %v1597, %v1659
    %v1676 = vmul.f32 %v1599, %v1660
    %v1677 = vmul.f32 %v1601, %v1661
    %v1678 = vmul.f32 %v1603, %v1662
    %v1679 = vmul.f32 %v1605, %v1663
    %v1680 = vmul.f32 %v1607, %v1664
    %v1681 = vmul.f32 %v1609, %v1665
    %v1682 = vmul.f32 %v1611, %v1666
    %v1683 = vmul.f32 %v1613, %v1667
    %v1684 = vmul.f32 %v1615, %v1668
    %v1685 = vmul.f32 %v1617, %v1669
    %v1686 = vmul.f32 %v1619, %v1670
    %v1687 = vmul.f32 %v1621, %v1671
    %v1688 = vmul.f32 %v1623, %v1672
    %v1689 = vmul.f32 %v1625, %v1673
    %v1690 = vpack.c.bf16 %v1374, %v1371
    %v1691 = vpack.c.bf16 %v1382, %v1379
    %v1692 = vpack.c.bf16 %v1390, %v1387
    %v1693 = vpack.c.bf16 %v1398, %v1395
    %v1694 = vpack.c.bf16 %v1406, %v1403
    %v1695 = vpack.c.bf16 %v1414, %v1411
    %v1696 = vpack.c.bf16 %v1422, %v1419
    %v1697 = vpack.c.bf16 %v1430, %v1427
    %v1698 = vpack.c.bf16 %v1675, %v1674
    %v1699 = vpack.c.bf16 %v1677, %v1676
    %v1700 = vpack.c.bf16 %v1679, %v1678
    %v1701 = vpack.c.bf16 %v1681, %v1680
    %v1702 = vpack.c.bf16 %v1683, %v1682
    %v1703 = vpack.c.bf16 %v1685, %v1684
    %v1704 = vpack.c.bf16 %v1687, %v1686
    %v1705 = vpack.c.bf16 %v1689, %v1688
    %1706 = vmatprep.subr.bf16.mxu0 0
    %1707 = vmatpush1.bf16.msra.mxu0 %v1705
    %1708 = vmatprep.subr.bf16.mxu0 0
    %1709 = vmatpush1.bf16.msra.mxu0 %v1704
    %1710 = vmatprep.subr.bf16.mxu0 0
    %1711 = vmatpush1.bf16.msra.mxu0 %v1703
    %1712 = vmatprep.subr.bf16.mxu0 0
    %1713 = vmatpush1.bf16.msra.mxu0 %v1702
    %1714 = vmatprep.subr.bf16.mxu0 0
    %1715 = vmatpush1.bf16.msra.mxu0 %v1701
    %1716 = vmatprep.subr.bf16.mxu0 0
    %1717 = vmatpush1.bf16.msra.mxu0 %v1700
    %1718 = vmatprep.subr.bf16.mxu0 0
    %1719 = vmatpush1.bf16.msra.mxu0 %v1699
    %1720 = vmatprep.subr.bf16.mxu0 0
    %1721 = vmatpush1.bf16.msra.mxu0 %v1698
    %1722 = vmatprep.subr.bf16.mxu0 0
    %1723 = vmatpush2.bf16.msra.mxu0 0
    %1724 = vmatprep.subr.bf16.mxu0 0
    %1725 = vmatpush2.bf16.msra.mxu0 0
    %1726 = vmatprep.subr.bf16.mxu0 0
    %1727 = vmatpush2.bf16.msra.mxu0 0
    %1728 = vmatprep.subr.bf16.mxu0 0
    %1729 = vmatpush2.bf16.msra.mxu0 0
    %1730 = vmatprep.subr.bf16.mxu0 0
    %1731 = vmatpush2.bf16.msra.mxu0 0
    %1732 = vmatprep.subr.bf16.mxu0 0
    %1733 = vmatpush2.bf16.msra.mxu0 0
    %1734 = vmatprep.subr.bf16.mxu0 0
    %1735 = vmatpush2.bf16.msra.mxu0 0
    %1736 = vmatprep.subr.bf16.mxu0 0
    %1737 = vmatpush2.bf16.msra.mxu0 0
    %1738 = vmatprep.mubr.bf16.mxu0 0
    %1739 = vmatmul.mubr.bf16.gmra.mxu0 %v1690
    %v1740 = vpop.f32.mrf.mxu0
    %v1741 = vadd.f32 0.0, %v1740
    %v1742 = vpop.f32.mrf.mxu0
    %v1743 = vpop.f32.mrf.mxu0
    %v1744 = vadd.f32 0.0, %v1743
    %v1745 = vpop.f32.mrf.mxu0
    %1746 = vmatprep.mubr.bf16.mxu0 0
    %1747 = vmatmul.mubr.bf16.gmra.mxu0 %v1691
    %v1748 = vpop.f32.mrf.mxu0
    %v1749 = vadd.f32 0.0, %v1748
    %v1750 = vpop.f32.mrf.mxu0
    %v1751 = vpop.f32.mrf.mxu0
    %v1752 = vadd.f32 0.0, %v1751
    %v1753 = vpop.f32.mrf.mxu0
    %1754 = vmatprep.mubr.bf16.mxu0 0
    %1755 = vmatmul.mubr.bf16.gmra.mxu0 %v1692
    %v1756 = vpop.f32.mrf.mxu0
    %v1757 = vadd.f32 0.0, %v1756
    %v1758 = vpop.f32.mrf.mxu0
    %v1759 = vpop.f32.mrf.mxu0
    %v1760 = vadd.f32 0.0, %v1759
    %v1761 = vpop.f32.mrf.mxu0
    %1762 = vmatprep.mubr.bf16.mxu0 0
    %1763 = vmatmul.mubr.bf16.gmra.mxu0 %v1693
    %v1764 = vpop.f32.mrf.mxu0
    %v1765 = vadd.f32 0.0, %v1764
    %v1766 = vpop.f32.mrf.mxu0
    %v1767 = vpop.f32.mrf.mxu0
    %v1768 = vadd.f32 0.0, %v1767
    %v1769 = vpop.f32.mrf.mxu0
    %1770 = vmatprep.mubr.bf16.mxu0 0
    %1771 = vmatmul.mubr.bf16.gmra.mxu0 %v1694
    %v1772 = vpop.f32.mrf.mxu0
    %v1773 = vadd.f32 0.0, %v1772
    %v1774 = vpop.f32.mrf.mxu0
    %v1775 = vpop.f32.mrf.mxu0
    %v1776 = vadd.f32 0.0, %v1775
    %v1777 = vpop.f32.mrf.mxu0
    %1778 = vmatprep.mubr.bf16.mxu0 0
    %1779 = vmatmul.mubr.bf16.gmra.mxu0 %v1695
    %v1780 = vpop.f32.mrf.mxu0
    %v1781 = vadd.f32 0.0, %v1780
    %v1782 = vpop.f32.mrf.mxu0
    %v1783 = vpop.f32.mrf.mxu0
    %v1784 = vadd.f32 0.0, %v1783
    %v1785 = vpop.f32.mrf.mxu0
    %1786 = vmatprep.mubr.bf16.mxu0 0
    %1787 = vmatmul.mubr.bf16.gmra.mxu0 %v1696
    %v1788 = vpop.f32.mrf.mxu0
    %v1789 = vadd.f32 0.0, %v1788
    %v1790 = vpop.f32.mrf.mxu0
    %v1791 = vpop.f32.mrf.mxu0
    %v1792 = vadd.f32 0.0, %v1791
    %v1793 = vpop.f32.mrf.mxu0
    %1794 = vmatprep.mubr.bf16.mxu0 0
    %1795 = vmatmul.mubr.bf16.gmra.mxu0 %v1697
    %v1796 = vpop.f32.mrf.mxu0
    %v1797 = vadd.f32 0.0, %v1796
    %v1798 = vpop.f32.mrf.mxu0
    %v1799 = vpop.f32.mrf.mxu0
    %v1800 = vadd.f32 0.0, %v1799
    %v1801 = vpop.f32.mrf.mxu0
    %1802 = vdwg.mxu0
    %v1803 = vmul.f32 %v1134, %v1741
    %v1804 = vmul.f32 %v1134, %v1744
    %v1805 = vmul.f32 %v1134, %v1749
    %v1806 = vmul.f32 %v1134, %v1752
    %v1807 = vmul.f32 %v1134, %v1757
    %v1808 = vmul.f32 %v1134, %v1760
    %v1809 = vmul.f32 %v1134, %v1765
    %v1810 = vmul.f32 %v1134, %v1768
    %v1811 = vmul.f32 %v1134, %v1773
    %v1812 = vmul.f32 %v1134, %v1776
    %v1813 = vmul.f32 %v1134, %v1781
    %v1814 = vmul.f32 %v1134, %v1784
    %v1815 = vmul.f32 %v1134, %v1789
    %v1816 = vmul.f32 %v1134, %v1792
    %v1817 = vmul.f32 %v1134, %v1797
    %v1818 = vmul.f32 %v1134, %v1800
    %v1819 = vadd.f32 %v1803, %v1184
    %v1820 = vadd.f32 %v1804, %v1185
    %v1821 = vadd.f32 %v1805, %v1186
    %v1822 = vadd.f32 %v1806, %v1187
    %v1823 = vadd.f32 %v1807, %v1188
    %v1824 = vadd.f32 %v1808, %v1189
    %v1825 = vadd.f32 %v1809, %v1190
    %v1826 = vadd.f32 %v1810, %v1191
    %v1827 = vadd.f32 %v1811, %v1192
    %v1828 = vadd.f32 %v1812, %v1193
    %v1829 = vadd.f32 %v1813, %v1194
    %v1830 = vadd.f32 %v1814, %v1195
    %v1831 = vadd.f32 %v1815, %v1196
    %v1832 = vadd.f32 %v1816, %v1197
    %v1833 = vadd.f32 %v1817, %v1198
    %v1834 = vadd.f32 %v1818, %v1199
    %s1835 = scalar_lea.vmem [#allocation6], 128
    %1836 = vst [vmem:[%s1835] sm:$0xff] %v1819
    %1837 = vst [vmem:[%s1835 + $0x8] sm:$0xff] %v1820
    %1838 = vst [vmem:[%s1835 + $0x10] sm:$0xff] %v1821
    %1839 = vst [vmem:[%s1835 + $0x18] sm:$0xff] %v1822
    %1840 = vst [vmem:[%s1835 + $0x20] sm:$0xff] %v1823
    %1841 = vst [vmem:[%s1835 + $0x28] sm:$0xff] %v1824
    %1842 = vst [vmem:[%s1835 + $0x30] sm:$0xff] %v1825
    %1843 = vst [vmem:[%s1835 + $0x38] sm:$0xff] %v1826
    %1844 = vst [vmem:[%s1835 + $0x40] sm:$0xff] %v1827
    %1845 = vst [vmem:[%s1835 + $0x48] sm:$0xff] %v1828
    %1846 = vst [vmem:[%s1835 + $0x50] sm:$0xff] %v1829
    %1847 = vst [vmem:[%s1835 + $0x58] sm:$0xff] %v1830
    %1848 = vst [vmem:[%s1835 + $0x60] sm:$0xff] %v1831
    %1849 = vst [vmem:[%s1835 + $0x68] sm:$0xff] %v1832
    %1850 = vst [vmem:[%s1835 + $0x70] sm:$0xff] %v1833
    %1851 = vst [vmem:[%s1835 + $0x78] sm:$0xff] %v1834
    // Predicated region
    $region22: #{tpu_custom_call.1} parent=1 // pred_check
      _
    $region23: #{tpu_custom_call.1} parent=1 // pred_check_branch
      %1853 = sbr.rel (0) target = $region25
    $region24: #{tpu_custom_call.1} parent=1 // pred_region
      %s1855 = ssub.s32 4096, 4096
      %1856 = vsyncadd [#allocation5], %s1855
      %s1857 = sshll.u32 [#allocation6], 4
      %s1858 = int_to_ptr.vmem [resolvable:$true] %s1857
      %1863 = dma.vmem_to_hbm [thread:$0]  %s1858, 4096, %s4, [#allocation5], 128, 128, 8
    $region25: #{tpu_custom_call.1} parent=1 // pred_fallthru
      _
    // Predicated region
    $region26: #{tpu_custom_call.1} parent=1 // pred_check
      _
    $region27: #{tpu_custom_call.1} parent=1 // pred_check_branch
      %1865 = sbr.rel (0) target = $region29
    $region28: #{tpu_custom_call.1} parent=1 // pred_region
      %1866 = dma.done [#allocation5], 4096
    $region29: #{tpu_custom_call.1} parent=1 // pred_fallthru
      _
    %1867 = vsyncpa [#allocation4], 1
    %1868 = vsyncpa [#allocation5], 1

</llo_original>
